<compile_context>
chip_gen: v6e
topology: v6e:2x2x1
jax: 0.10.0
libtpu: 0.0.40
codegen_flags: <defaults>
</compile_context>

<pallas_src>
import jax
import jax.numpy as jnp
from jax.experimental import pallas as pl
from jax.experimental.pallas import tpu as pltpu

HIDDEN = 16            # hidden_dim
RANK_DIM = 8           # rank_embedding_dim
SUIT_DIM = 8           # suit_embedding_dim
CARD_DIM = RANK_DIM + SUIT_DIM   # 16
EDGE_DIM = 2           # edge_attr_dim
CARDS = 4              # cards per hand (fixed ring topology)
CODE_PAD = 64          # 13*4 = 52 combined rank/suit codes, padded to a friendly 64
EDGE_ROWS = 8          # rows 0:2 cw attr, 2:4 ccw attr, 4 = ones (folded edge bias), 5:8 zero
MAX_HB = 1024          # cap on hands per block (keeps live intermediates to a few MiB)


def hand_gnn_kernel(code_ref, edge_ref, wc_ref, we_ref, wn_ref, o_ref):
    f32 = jnp.float32
    H = HIDDEN
    cols = code_ref.shape[-1]     # CARDS * hb (static)
    hb = cols // CARDS            # multiple of 128 -> rolls are whole-vreg lane rotations

    code = code_ref[0]            # (1, cols) int32: combined rank*4 + suit per node
    e = edge_ref[0]               # (EDGE_ROWS, cols) bf16 packed edge attrs (+ ones row)

    wc = wc_ref[...]              # (H, CODE_PAD)  fused embed+projector table (bias folded)
    we = we_ref[...]              # (4H, EDGE_ROWS) block-diag edge linear, both dirs x layers
    w1t = wn_ref[0:H, :]          # (H, H)
    w2t = wn_ref[H:2 * H, :]      # (H, H)
    b1 = wn_ref[2 * H:3 * H, 0:1]
    b2 = wn_ref[2 * H:3 * H, 1:2]

    # embedding lookup + card_emb_projector fused into one MXU matmul (one-hot of codes)
    iota = jax.lax.broadcasted_iota(jnp.int32, (CODE_PAD, cols), 0)
    onehot = (iota == code).astype(f32)                              # (CODE_PAD, cols)
    x = jnp.dot(wc, onehot, preferred_element_type=f32)              # (H, cols)

    # both layers' & both directions' edge projections (+ edge biases) in one matmul
    e_emb = jnp.dot(we, e.astype(f32), preferred_element_type=f32)   # (4H, cols)
    # row blocks of e_emb: [cw layer1; cw layer2; ccw layer1; ccw layer2]

    # hoisted bias broadcasts (JAX does not CSE broadcast_in_dim)
    b1b = jnp.broadcast_to(b1, (H, cols))
    b2b = jnp.broadcast_to(b2, (H, cols))

    def gine_layer(x, layer):
        # messages = ReLU(x_neighbour + Lin_edge(edge_attr) + b_edge); edge bias already
        # folded into e_emb via the ones row.  Neighbour gather on the fixed 4-card ring
        # is a static lane rotation (XLU slot).
        x_prev = pltpu.roll(x, shift=hb, axis=1)          # x[prev(i)]
        x_next = pltpu.roll(x, shift=3 * hb, axis=1)      # x[next(i)]
        msg_cw = jnp.maximum(x_prev + e_emb[layer * H:(layer + 1) * H, :], 0.0)
        msg_ccw = jnp.maximum(x_next + e_emb[(2 + layer) * H:(3 + layer) * H, :], 0.0)
        h = x + msg_cw + msg_ccw                          # (1+eps)*x_i + sum msgs, eps=0
        h1 = jnp.maximum(jnp.dot(w1t, h, preferred_element_type=f32) + b1b, 0.0)
        h2 = jnp.dot(w2t, h1, preferred_element_type=f32) + b2b
        return jnp.maximum(h2, 0.0)                       # GINEConv nn + module-level ReLU

    x = gine_layer(x, 0)
    x = gine_layer(x, 1)

    # scatter-mean over the 4 card positions of each hand -> lane-dense (H, hb)
    pooled = (x[:, 0 * hb:1 * hb] + x[:, 1 * hb:2 * hb]
              + x[:, 2 * hb:3 * hb] + x[:, 3 * hb:4 * hb]) * 0.25
    o_ref[0] = pooled


def _pick_hb(num_hands):
    # Hands per grid block (lane-dense; must stay a multiple of 128 so the ring rolls are
    # whole-vreg rotations).  Large blocks amortize per-grid-step overhead; keep >=2
    # blocks when there are enough hands so the "parallel" axis uses both v7x TCs.
    def rup128(x):
        return ((x + 127) // 128) * 128
    if num_hands <= 2 * 128:
        return 128
    return min(rup128((num_hands + 1) // 2), MAX_HB)


def hand_gnn_forward(ranks, suits, src, dst, edge_attr, num_hands, w_card, w_edge, w_node):
    n_nodes = num_hands * CARDS
    hb = _pick_hb(num_hands)
    nb = (num_hands + hb - 1) // hb
    hands_pad = nb * hb

    # Route each edge's attrs to its destination node, split by ring direction:
    # cw: src == prev(dst) within the same hand; ccw: src == next(dst).
    # Assumes exactly one incoming edge per direction per node (true for HandGNN graphs).
    # TODO(synk): general / variable-degree graphs need scalar-prefetched src/dst tables
    # driving in-kernel gathers instead of the fixed-ring rotation.
    same_hand = (src // CARDS) == (dst // CARDS)
    pos_src = src % CARDS
    pos_dst = dst % CARDS
    is_cw = same_hand & (pos_src == (pos_dst + CARDS - 1) % CARDS)
    is_ccw = same_hand & (pos_src == (pos_dst + 1) % CARDS)
    ea = edge_attr.astype(jnp.float32)
    e_nat = jnp.zeros((n_nodes, EDGE_ROWS), jnp.float32)
    e_nat = e_nat.at[:, 4].set(1.0)                         # ones row -> folded edge biases
    e_nat = e_nat.at[dst, 0:EDGE_DIM].add(jnp.where(is_cw[:, None], ea, 0.0))
    e_nat = e_nat.at[dst, EDGE_DIM:2 * EDGE_DIM].add(jnp.where(is_ccw[:, None], ea, 0.0))

    codes = (ranks.astype(jnp.int32) * 4 + suits.astype(jnp.int32))[:, None]   # (n_nodes,1)

    def to_kernel_layout(a_nat, dtype):
        # (num_hands*CARDS, F) -> (nb, F, CARDS*hb), card-position-major node lanes
        feat = a_nat.shape[-1]
        a = a_nat.reshape(num_hands, CARDS, feat)
        a = jnp.pad(a, ((0, hands_pad - num_hands), (0, 0), (0, 0)))
        a = a.reshape(nb, hb, CARDS, feat).transpose(0, 3, 2, 1)
        return a.reshape(nb, feat, CARDS * hb).astype(dtype)

    codes_k = to_kernel_layout(codes, jnp.int32)            # (nb, 1, 4*hb): 4 B/node
    edges_k = to_kernel_layout(e_nat, jnp.bfloat16)         # (nb, 8, 4*hb): 16 B/node

    out = pl.pallas_call(
        hand_gnn_kernel,
        out_shape=jax.ShapeDtypeStruct((nb, HIDDEN, hb), jnp.float32),
        grid=(nb,),
        in_specs=[
            pl.BlockSpec((1, 1, CARDS * hb), lambda i: (i, 0, 0)),
            pl.BlockSpec((1, EDGE_ROWS, CARDS * hb), lambda i: (i, 0, 0)),
            pl.BlockSpec((HIDDEN, CODE_PAD), lambda i: (0, 0)),
            pl.BlockSpec((4 * HIDDEN, EDGE_ROWS), lambda i: (0, 0)),
            pl.BlockSpec((3 * HIDDEN, HIDDEN), lambda i: (0, 0)),
        ],
        out_specs=pl.BlockSpec((1, HIDDEN, hb), lambda i: (i, 0, 0)),
        compiler_params=pltpu.CompilerParams(
            dimension_semantics=("parallel",)),   # v7x: shard hand blocks across both TCs
    )(codes_k, edges_k, w_card, w_edge, w_node)

    # lane-dense kernel output (nb, H, hb) -> user-facing (num_hands, H)
    return out.transpose(0, 2, 1).reshape(hands_pad, HIDDEN)[:num_hands]


def init_params(key):
    ks = jax.random.split(key, 12)
    s = 0.1
    return {
        "rank_table": s * jax.random.normal(ks[0], (13, RANK_DIM), jnp.float32),
        "suit_table": s * jax.random.normal(ks[1], (4, SUIT_DIM), jnp.float32),
        "wproj": s * jax.random.normal(ks[2], (CARD_DIM, HIDDEN), jnp.float32),
        "bproj": s * jax.random.normal(ks[3], (HIDDEN,), jnp.float32),
        "w1": s * jax.random.normal(ks[4], (HIDDEN, HIDDEN), jnp.float32),
        "b1": s * jax.random.normal(ks[5], (HIDDEN,), jnp.float32),
        "w2": s * jax.random.normal(ks[6], (HIDDEN, HIDDEN), jnp.float32),
        "b2": s * jax.random.normal(ks[7], (HIDDEN,), jnp.float32),
        "we1": s * jax.random.normal(ks[8], (EDGE_DIM, HIDDEN), jnp.float32),
        "be1": s * jax.random.normal(ks[9], (HIDDEN,), jnp.float32),
        "we2": s * jax.random.normal(ks[10], (EDGE_DIM, HIDDEN), jnp.float32),
        "be2": s * jax.random.normal(ks[11], (HIDDEN,), jnp.float32),
    }


def pack_params(p):
    f32 = jnp.float32
    H = HIDDEN
    # Fuse rank/suit embedding tables + card_emb_projector (+ bias) into one (52, H)
    # table indexed by code = rank*4 + suit, stored transposed & lane-padded.
    a_rank = p["rank_table"] @ p["wproj"][:RANK_DIM]        # (13, H)
    a_suit = p["suit_table"] @ p["wproj"][RANK_DIM:]        # (4, H)
    a_comb = (a_rank[:, None, :] + a_suit[None, :, :] + p["bproj"]).reshape(13 * 4, H)
    w_card = jnp.zeros((H, CODE_PAD), f32).at[:, :13 * 4].set(a_comb.T)

    # Block-diagonal edge linear for both ring directions x both GINE layers, with the
    # edge biases folded into column 4 (matched by the ones row of the edge operand).
    w_edge = jnp.zeros((4 * H, EDGE_ROWS), f32)
    w_edge = w_edge.at[0 * H:1 * H, 0:EDGE_DIM].set(p["we1"].T)               # cw,  layer 1
    w_edge = w_edge.at[1 * H:2 * H, 0:EDGE_DIM].set(p["we2"].T)               # cw,  layer 2
    w_edge = w_edge.at[2 * H:3 * H, EDGE_DIM:2 * EDGE_DIM].set(p["we1"].T)    # ccw, layer 1
    w_edge = w_edge.at[3 * H:4 * H, EDGE_DIM:2 * EDGE_DIM].set(p["we2"].T)    # ccw, layer 2
    w_edge = w_edge.at[0 * H:1 * H, 4].set(p["be1"])
    w_edge = w_edge.at[1 * H:2 * H, 4].set(p["be2"])
    w_edge = w_edge.at[2 * H:3 * H, 4].set(p["be1"])
    w_edge = w_edge.at[3 * H:4 * H, 4].set(p["be2"])

    # Shared node MLP (transposed) + its biases packed as columns.
    w_node = jnp.zeros((3 * H, H), f32)
    w_node = w_node.at[0:H].set(p["w1"].T)
    w_node = w_node.at[H:2 * H].set(p["w2"].T)
    w_node = w_node.at[2 * H:3 * H, 0].set(p["b1"])
    w_node = w_node.at[2 * H:3 * H, 1].set(p["b2"])
    return w_card, w_edge, w_node


def reference_forward(card_emb, src, dst, edge_attr, batch, num_hands, p):
    x = card_emb @ p["wproj"] + p["bproj"]
    for we, be in ((p["we1"], p["be1"]), (p["we2"], p["be2"])):
        e = edge_attr @ we + be
        msg = jnp.maximum(x[src] + e, 0.0)
        agg = jnp.zeros_like(x).at[dst].add(msg)
        h = x + agg
        h = jnp.maximum(h @ p["w1"] + p["b1"], 0.0) @ p["w2"] + p["b2"]
        x = jnp.maximum(h, 0.0)
    pooled = jnp.zeros((num_hands, HIDDEN), x.dtype).at[batch].add(x)
    cnt = jnp.zeros((num_hands,), x.dtype).at[batch].add(1.0)
    return pooled / cnt[:, None]


if __name__ == "__main__":
    key = jax.random.PRNGKey(0)
    k_param, k_rank, k_suit, k_edge = jax.random.split(key, 4)
    p = init_params(k_param)
    w_card, w_edge, w_node = pack_params(p)

    num_hands = 250                      # 2 grid blocks of hb=128, exercises hand padding
    n_nodes = num_hands * CARDS
    ranks = jax.random.randint(k_rank, (n_nodes,), 0, 13)
    suits = jax.random.randint(k_suit, (n_nodes,), 0, 4)
    batch = jnp.repeat(jnp.arange(num_hands, dtype=jnp.int32), CARDS)

    # ring edges (both directions) within each 4-card hand, PyG-style edge_index
    node = jnp.arange(n_nodes, dtype=jnp.int32)
    nxt = (node // CARDS) * CARDS + (node % CARDS + 1) % CARDS
    src = jnp.concatenate([node, nxt])
    dst = jnp.concatenate([nxt, node])
    edge_attr = 0.1 * jax.random.normal(k_edge, (src.shape[0], EDGE_DIM), jnp.float32)

    out = hand_gnn_forward(ranks, suits, src, dst, edge_attr, num_hands,
                           w_card, w_edge, w_node)
    out = jax.block_until_ready(out)
    assert out.shape == (num_hands, HIDDEN)

    # pure-JAX reference using the raw (unfused) parameters
    card_emb = jnp.concatenate([p["rank_table"][ranks], p["suit_table"][suits]], axis=1)
    ref = reference_forward(card_emb, src, dst, edge_attr, batch, num_hands, p)
    err = float(jnp.max(jnp.abs(out - ref)))
    assert err < 1e-2, f"kernel/reference mismatch: max abs err {err}"
    print("KERNEL_OK")
</pallas_src>

<mosaic_0001>
module attributes {stable_mosaic.version = 11 : i64} {
  func.func @hand_gnn_kernel(%arg0: i32, %arg1: memref<1x1x512xi32, #tpu.memory_space<vmem>>, %arg2: memref<1x8x512xbf16, #tpu.memory_space<vmem>>, %arg3: memref<16x64xf32, #tpu.memory_space<vmem>>, %arg4: memref<64x8xf32, #tpu.memory_space<vmem>>, %arg5: memref<48x16xf32, #tpu.memory_space<vmem>>, %arg6: memref<1x16x128xf32, #tpu.memory_space<vmem>>) attributes {dimension_semantics = [#tpu.dimension_semantics<parallel>], iteration_bounds = array<i64: 2>, scalar_prefetch = 0 : i64, scratch_operands = 0 : i64, tpu.core_type = #tpu.core_type<tc>, window_params = [{transform_indices = @transform_0, window_bounds = array<i64: 1, 1, 512>}, {transform_indices = @transform_1, window_bounds = array<i64: 1, 8, 512>}, {pipeline_mode = #tpu.pipeline_mode<synchronous>, transform_indices = @transform_2, window_bounds = array<i64: 16, 64>}, {pipeline_mode = #tpu.pipeline_mode<synchronous>, transform_indices = @transform_3, window_bounds = array<i64: 64, 8>}, {pipeline_mode = #tpu.pipeline_mode<synchronous>, transform_indices = @transform_4, window_bounds = array<i64: 48, 16>}, {transform_indices = @transform_5, window_bounds = array<i64: 1, 16, 128>}]} {
    %c0 = arith.constant 0 : index
    %c0_0 = arith.constant 0 : index
    %c0_1 = arith.constant 0 : index
    %0 = vector.load %arg1[%c0, %c0_0, %c0_1] : memref<1x1x512xi32, #tpu.memory_space<vmem>>, vector<1x1x512xi32>
    %1 = vector.shape_cast %0 : vector<1x1x512xi32> to vector<1x512xi32>
    %c0_2 = arith.constant 0 : index
    %c0_3 = arith.constant 0 : index
    %c0_4 = arith.constant 0 : index
    %2 = vector.load %arg2[%c0_2, %c0_3, %c0_4] : memref<1x8x512xbf16, #tpu.memory_space<vmem>>, vector<1x8x512xbf16>
    %3 = vector.shape_cast %2 : vector<1x8x512xbf16> to vector<8x512xbf16>
    %c0_5 = arith.constant 0 : index
    %c0_6 = arith.constant 0 : index
    %4 = vector.load %arg3[%c0_5, %c0_6] : memref<16x64xf32, #tpu.memory_space<vmem>>, vector<16x64xf32>
    %c0_7 = arith.constant 0 : index
    %c0_8 = arith.constant 0 : index
    %5 = vector.load %arg4[%c0_7, %c0_8] : memref<64x8xf32, #tpu.memory_space<vmem>>, vector<64x8xf32>
    %c0_9 = arith.constant 0 : index
    %c0_10 = arith.constant 0 : index
    %6 = vector.load %arg5[%c0_9, %c0_10] : memref<48x16xf32, #tpu.memory_space<vmem>>, vector<16x16xf32>
    %c16 = arith.constant 16 : index
    %c0_11 = arith.constant 0 : index
    %7 = vector.load %arg5[%c16, %c0_11] : memref<48x16xf32, #tpu.memory_space<vmem>>, vector<16x16xf32>
    %c32 = arith.constant 32 : index
    %c0_12 = arith.constant 0 : index
    %8 = vector.load %arg5[%c32, %c0_12] : memref<48x16xf32, #tpu.memory_space<vmem>>, vector<16x1xf32>
    %c32_13 = arith.constant 32 : index
    %c1 = arith.constant 1 : index
    %9 = vector.load %arg5[%c32_13, %c1] : memref<48x16xf32, #tpu.memory_space<vmem>>, vector<16x1xf32>
    %10 = tpu.iota {dimensions = array<i32: 0>} : vector<64x512xi32>
    %11 = vector.broadcast %1 : vector<1x512xi32> to vector<64x512xi32>
    %12 = arith.cmpi eq, %10, %11 : vector<64x512xi32>
    %13 = arith.extui %12 : vector<64x512xi1> to vector<64x512xi32>
    %14 = arith.sitofp %13 : vector<64x512xi32> to vector<64x512xf32>
    %cst = arith.constant dense<0.000000e+00> : vector<16x512xf32>
    %15 = tpu.matmul %4, %14, %cst {dimension_numbers = #tpu.dot_dimension_numbers<[1], [0], [0], [1], [0, 0, 1, 1], [], []>} : vector<16x64xf32>, vector<64x512xf32>, vector<16x512xf32> -> vector<16x512xf32>
    %16 = arith.extf %3 : vector<8x512xbf16> to vector<8x512xf32>
    %cst_14 = arith.constant dense<0.000000e+00> : vector<64x512xf32>
    %17 = tpu.matmul %5, %16, %cst_14 {dimension_numbers = #tpu.dot_dimension_numbers<[1], [0], [0], [1], [0, 0, 1, 1], [], []>} : vector<64x8xf32>, vector<8x512xf32>, vector<64x512xf32> -> vector<64x512xf32>
    %18 = vector.shape_cast %8 : vector<16x1xf32> to vector<16x1xf32>
    %19 = vector.broadcast %18 : vector<16x1xf32> to vector<16x512xf32>
    %20 = vector.shape_cast %9 : vector<16x1xf32> to vector<16x1xf32>
    %21 = vector.broadcast %20 : vector<16x1xf32> to vector<16x512xf32>
    %c128_i32 = arith.constant 128 : i32
    %22 = tpu.dynamic_rotate %15 by %c128_i32 dim 1 : vector<16x512xf32>, i32 -> vector<16x512xf32>
    %c384_i32 = arith.constant 384 : i32
    %23 = tpu.dynamic_rotate %15 by %c384_i32 dim 1 : vector<16x512xf32>, i32 -> vector<16x512xf32>
    %24 = vector.extract_strided_slice %17 {offsets = [0, 0], sizes = [16, 512], strides = [1, 1]} : vector<64x512xf32> to vector<16x512xf32>
    %25 = arith.addf %22, %24 : vector<16x512xf32>
    %cst_15 = arith.constant 0.000000e+00 : f32
    %26 = vector.broadcast %cst_15 : f32 to vector<16x512xf32>
    %27 = arith.maximumf %25, %26 : vector<16x512xf32>
    %28 = vector.extract_strided_slice %17 {offsets = [32, 0], sizes = [16, 512], strides = [1, 1]} : vector<64x512xf32> to vector<16x512xf32>
    %29 = arith.addf %23, %28 : vector<16x512xf32>
    %cst_16 = arith.constant 0.000000e+00 : f32
    %30 = vector.broadcast %cst_16 : f32 to vector<16x512xf32>
    %31 = arith.maximumf %29, %30 : vector<16x512xf32>
    %32 = arith.addf %15, %27 : vector<16x512xf32>
    %33 = arith.addf %32, %31 : vector<16x512xf32>
    %cst_17 = arith.constant dense<0.000000e+00> : vector<16x512xf32>
    %34 = tpu.matmul %6, %33, %cst_17 {dimension_numbers = #tpu.dot_dimension_numbers<[1], [0], [0], [1], [0, 0, 1, 1], [], []>} : vector<16x16xf32>, vector<16x512xf32>, vector<16x512xf32> -> vector<16x512xf32>
    %35 = arith.addf %34, %19 : vector<16x512xf32>
    %cst_18 = arith.constant 0.000000e+00 : f32
    %36 = vector.broadcast %cst_18 : f32 to vector<16x512xf32>
    %37 = arith.maximumf %35, %36 : vector<16x512xf32>
    %cst_19 = arith.constant dense<0.000000e+00> : vector<16x512xf32>
    %38 = tpu.matmul %7, %37, %cst_19 {dimension_numbers = #tpu.dot_dimension_numbers<[1], [0], [0], [1], [0, 0, 1, 1], [], []>} : vector<16x16xf32>, vector<16x512xf32>, vector<16x512xf32> -> vector<16x512xf32>
    %39 = arith.addf %38, %21 : vector<16x512xf32>
    %cst_20 = arith.constant 0.000000e+00 : f32
    %40 = vector.broadcast %cst_20 : f32 to vector<16x512xf32>
    %41 = arith.maximumf %39, %40 : vector<16x512xf32>
    %c128_i32_21 = arith.constant 128 : i32
    %42 = tpu.dynamic_rotate %41 by %c128_i32_21 dim 1 : vector<16x512xf32>, i32 -> vector<16x512xf32>
    %c384_i32_22 = arith.constant 384 : i32
    %43 = tpu.dynamic_rotate %41 by %c384_i32_22 dim 1 : vector<16x512xf32>, i32 -> vector<16x512xf32>
    %44 = vector.extract_strided_slice %17 {offsets = [16, 0], sizes = [16, 512], strides = [1, 1]} : vector<64x512xf32> to vector<16x512xf32>
    %45 = arith.addf %42, %44 : vector<16x512xf32>
    %cst_23 = arith.constant 0.000000e+00 : f32
    %46 = vector.broadcast %cst_23 : f32 to vector<16x512xf32>
    %47 = arith.maximumf %45, %46 : vector<16x512xf32>
    %48 = vector.extract_strided_slice %17 {offsets = [48, 0], sizes = [16, 512], strides = [1, 1]} : vector<64x512xf32> to vector<16x512xf32>
    %49 = arith.addf %43, %48 : vector<16x512xf32>
    %cst_24 = arith.constant 0.000000e+00 : f32
    %50 = vector.broadcast %cst_24 : f32 to vector<16x512xf32>
    %51 = arith.maximumf %49, %50 : vector<16x512xf32>
    %52 = arith.addf %41, %47 : vector<16x512xf32>
    %53 = arith.addf %52, %51 : vector<16x512xf32>
    %cst_25 = arith.constant dense<0.000000e+00> : vector<16x512xf32>
    %54 = tpu.matmul %6, %53, %cst_25 {dimension_numbers = #tpu.dot_dimension_numbers<[1], [0], [0], [1], [0, 0, 1, 1], [], []>} : vector<16x16xf32>, vector<16x512xf32>, vector<16x512xf32> -> vector<16x512xf32>
    %55 = arith.addf %54, %19 : vector<16x512xf32>
    %cst_26 = arith.constant 0.000000e+00 : f32
    %56 = vector.broadcast %cst_26 : f32 to vector<16x512xf32>
    %57 = arith.maximumf %55, %56 : vector<16x512xf32>
    %cst_27 = arith.constant dense<0.000000e+00> : vector<16x512xf32>
    %58 = tpu.matmul %7, %57, %cst_27 {dimension_numbers = #tpu.dot_dimension_numbers<[1], [0], [0], [1], [0, 0, 1, 1], [], []>} : vector<16x16xf32>, vector<16x512xf32>, vector<16x512xf32> -> vector<16x512xf32>
    %59 = arith.addf %58, %21 : vector<16x512xf32>
    %cst_28 = arith.constant 0.000000e+00 : f32
    %60 = vector.broadcast %cst_28 : f32 to vector<16x512xf32>
    %61 = arith.maximumf %59, %60 : vector<16x512xf32>
    %62 = vector.extract_strided_slice %61 {offsets = [0, 0], sizes = [16, 128], strides = [1, 1]} : vector<16x512xf32> to vector<16x128xf32>
    %63 = vector.extract_strided_slice %61 {offsets = [0, 128], sizes = [16, 128], strides = [1, 1]} : vector<16x512xf32> to vector<16x128xf32>
    %64 = arith.addf %62, %63 : vector<16x128xf32>
    %65 = vector.extract_strided_slice %61 {offsets = [0, 256], sizes = [16, 128], strides = [1, 1]} : vector<16x512xf32> to vector<16x128xf32>
    %66 = arith.addf %64, %65 : vector<16x128xf32>
    %67 = vector.extract_strided_slice %61 {offsets = [0, 384], sizes = [16, 128], strides = [1, 1]} : vector<16x512xf32> to vector<16x128xf32>
    %68 = arith.addf %66, %67 : vector<16x128xf32>
    %cst_29 = arith.constant 2.500000e-01 : f32
    %69 = vector.broadcast %cst_29 : f32 to vector<16x128xf32>
    %70 = arith.mulf %68, %69 : vector<16x128xf32>
    %c0_30 = arith.constant 0 : index
    %c0_31 = arith.constant 0 : index
    %c0_32 = arith.constant 0 : index
    %71 = vector.load %arg6[%c0_30, %c0_31, %c0_32] : memref<1x16x128xf32, #tpu.memory_space<vmem>>, vector<1x16x128xf32>
    %72 = vector.shape_cast %71 : vector<1x16x128xf32> to vector<16x128xf32>
    %73 = vector.shape_cast %70 : vector<16x128xf32> to vector<1x16x128xf32>
    tpu.vector_store %arg6[%c0_30, %c0_31, %c0_32], %73 {strides = array<i32>} : memref<1x16x128xf32, #tpu.memory_space<vmem>>, vector<1x16x128xf32>,
    return
  }
  func.func @transform_0(%arg0: i32) -> (i32, i32, i32) {
    %c0_i32 = arith.constant 0 : i32
    %c0_i32_0 = arith.constant 0 : i32
    %c0_i32_1 = arith.constant 0 : i32
    return %arg0, %c0_i32, %c0_i32_0 : i32, i32, i32
  }
  func.func @transform_1(%arg0: i32) -> (i32, i32, i32) {
    %c0_i32 = arith.constant 0 : i32
    %c0_i32_0 = arith.constant 0 : i32
    %c0_i32_1 = arith.constant 0 : i32
    return %arg0, %c0_i32, %c0_i32_0 : i32, i32, i32
  }
  func.func @transform_2(%arg0: i32) -> (i32, i32) {
    %c0_i32 = arith.constant 0 : i32
    %c0_i32_0 = arith.constant 0 : i32
    %c0_i32_1 = arith.constant 0 : i32
    return %c0_i32, %c0_i32_0 : i32, i32
  }
  func.func @transform_3(%arg0: i32) -> (i32, i32) {
    %c0_i32 = arith.constant 0 : i32
    %c0_i32_0 = arith.constant 0 : i32
    %c0_i32_1 = arith.constant 0 : i32
    return %c0_i32, %c0_i32_0 : i32, i32
  }
  func.func @transform_4(%arg0: i32) -> (i32, i32) {
    %c0_i32 = arith.constant 0 : i32
    %c0_i32_0 = arith.constant 0 : i32
    %c0_i32_1 = arith.constant 0 : i32
    return %c0_i32, %c0_i32_0 : i32, i32
  }
  func.func @transform_5(%arg0: i32) -> (i32, i32, i32) {
    %c0_i32 = arith.constant 0 : i32
    %c0_i32_0 = arith.constant 0 : i32
    %c0_i32_1 = arith.constant 0 : i32
    return %arg0, %c0_i32, %c0_i32_0 : i32, i32, i32
  }
}

</mosaic_0001>

<llo_original>
// kernel: tpu_custom_call.1
$region0: #{tpu_custom_call.1}
  #allocation0 [shape = 'u32[]', space=smem, size = 0x4, offset = 0x4, fixed_abs, tag = 'smem constant byte address 0x4 - core index']
  #allocation1 [shape = 'u32[144,128]{1,0:T(1,128)}', space=vmem, size = 0x12000, scoped, tag = 'internal scratch']
  %s0 = inlined_call_operand.vmem [shape: s32[2,1,512], index: 0, kind: input, shape index: {}]
  %s1 = inlined_call_operand.vmem [shape: bf16[2,8,512], index: 1, kind: input, shape index: {}]
  %s2 = inlined_call_operand.vmem [shape: f32[16,64], index: 2, kind: input, shape index: {}]
  %s3 = inlined_call_operand.vmem [shape: f32[64,8], index: 3, kind: input, shape index: {}]
  %s4 = inlined_call_operand.vmem [shape: f32[48,16], index: 4, kind: input, shape index: {}]
  %s5 = inlined_call_operand.hbm [shape: f32[2,16,128], index: 5, kind: output, shape index: {}]
  %s6 = sld [smem:[#allocation0]]
  $region53: #{tpu_custom_call.1} parent=0
    _
  %s8 = ssub.s32 1, %s6
  %s9 = scalar_select 0, %s8, %s6
  $region1: #{tpu_custom_call.1} parent=0
    #allocation2 [shape = 'u8[16384]{0}', space=vmem, size = 0x4000, scoped, tag = 'output window, operand 0']
    #allocation3 [shape = 's32[2]{0}', space=sflag, size = 0x8, scoped, tag = 'scoped memory for tpu_custom_call.1']
    %10 = vsyncpa [#allocation3], 0
    %s11 = scalar_lea.sflag [#allocation3], 1
    %12 = vsyncpa %s11, 0
    loop: start=0, step=1, limit=4
    $region2: #{tpu_custom_call.1} parent=1 // loop_pre_header
      _
    $region3: #{tpu_custom_call.1} parent=1 // loop_header
      %s14 = sphi 0, %s18
      %p15 = scmp.ge.s32.totalorder %s14, 4
      %s24 = sphi 0, %s26
      %s27 = sphi 0, %s24
      %s28 = sphi 0, %s27
      %s44 = sphi 0, %s28
      %s50 = sphi 0, %s52
      %s53 = sphi 0, %s50
      %s54 = sphi 0, %s53
      %s70 = sphi 0, %s54
      %s74 = sphi 0, %s74
      %s76 = sphi 0, %s74
      %s77 = sphi 0, %s76
      %s91 = sphi 0, %s77
      %s95 = sphi 0, %s95
      %s97 = sphi 0, %s95
      %s98 = sphi 0, %s97
      %s112 = sphi 0, %s98
      %s116 = sphi 0, %s116
      %s118 = sphi 0, %s116
      %s119 = sphi 0, %s118
      %s133 = sphi 0, %s119
      %s139 = sphi 0, %s141
      %s142 = sphi 0, %s139
      %s143 = sphi 0, %s142
      %s159 = sphi 0, %s143
    $region4: #{tpu_custom_call.1} parent=1 // loop_header_branch
      %17 = sbr.rel (%p15) target = $region8
    $region5: #{tpu_custom_call.1} parent=1 // loop_body
      %s19 = ssub.s32 %s14, 1
      %s20 = ssub.s32 %s14, 2
      %s21 = sadd.s32 %s14, 1
      %s22 = ssub.s32 %s14, %s21
      %p23 = scmp.eq.s32.totalorder %s22, 0
      %s25 = sadd.s32 %s24, 1
      %s26 = scalar_select %p23, %s24, %s25
      %p29 = pneg %p23
      %p30 = scmp.eq.s32.totalorder %s14, 1
      %p31 = por %p29, %p30
      %p32 = scmp.ne.s32.totalorder %s24, %s27
      %p33 = scmp.eq.s32.totalorder %s14, 0
      %p34 = por %p32, %p33
      %p35 = scmp.ne.s32.totalorder %s24, %s27
      %p36 = scmp.eq.s32.totalorder %s19, 1
      %p37 = por %p35, %p36
      %p38 = scmp.ne.s32.totalorder %s27, %s28
      %p39 = scmp.eq.s32.totalorder %s19, 0
      %p40 = por %p38, %p39
      %p41 = scmp.ne.s32.totalorder %s27, %s28
      %p42 = scmp.eq.s32.totalorder %s20, 1
      %p43 = por %p41, %p42
      %p45 = scmp.ne.s32.totalorder %s28, %s44
      %p46 = scmp.eq.s32.totalorder %s20, 0
      %p47 = por %p45, %p46
      %s48 = ssub.s32 %s14, %s21
      %p49 = scmp.eq.s32.totalorder %s48, 0
      %s51 = sadd.s32 %s50, 1
      %s52 = scalar_select %p49, %s50, %s51
      %p55 = pneg %p49
      %p56 = scmp.eq.s32.totalorder %s14, 1
      %p57 = por %p55, %p56
      %p58 = scmp.ne.s32.totalorder %s50, %s53
      %p59 = scmp.eq.s32.totalorder %s14, 0
      %p60 = por %p58, %p59
      %p61 = scmp.ne.s32.totalorder %s50, %s53
      %p62 = scmp.eq.s32.totalorder %s19, 1
      %p63 = por %p61, %p62
      %p64 = scmp.ne.s32.totalorder %s53, %s54
      %p65 = scmp.eq.s32.totalorder %s19, 0
      %p66 = por %p64, %p65
      %p67 = scmp.ne.s32.totalorder %s53, %s54
      %p68 = scmp.eq.s32.totalorder %s20, 1
      %p69 = por %p67, %p68
      %p71 = scmp.ne.s32.totalorder %s54, %s70
      %p72 = scmp.eq.s32.totalorder %s20, 0
      %p73 = por %p71, %p72
      %s75 = sadd.s32 %s74, 1
      %p78 = scmp.eq.s32.totalorder %s14, 1
      %p79 = scmp.ne.s32.totalorder %s74, %s76
      %p80 = scmp.eq.s32.totalorder %s14, 0
      %p81 = por %p79, %p80
      %p82 = scmp.ne.s32.totalorder %s74, %s76
      %p83 = scmp.eq.s32.totalorder %s19, 1
      %p84 = por %p82, %p83
      %p85 = scmp.ne.s32.totalorder %s76, %s77
      %p86 = scmp.eq.s32.totalorder %s19, 0
      %p87 = por %p85, %p86
      %p88 = scmp.ne.s32.totalorder %s76, %s77
      %p89 = scmp.eq.s32.totalorder %s20, 1
      %p90 = por %p88, %p89
      %p92 = scmp.ne.s32.totalorder %s77, %s91
      %p93 = scmp.eq.s32.totalorder %s20, 0
      %p94 = por %p92, %p93
      %s96 = sadd.s32 %s95, 1
      %p99 = scmp.eq.s32.totalorder %s14, 1
      %p100 = scmp.ne.s32.totalorder %s95, %s97
      %p101 = scmp.eq.s32.totalorder %s14, 0
      %p102 = por %p100, %p101
      %p103 = scmp.ne.s32.totalorder %s95, %s97
      %p104 = scmp.eq.s32.totalorder %s19, 1
      %p105 = por %p103, %p104
      %p106 = scmp.ne.s32.totalorder %s97, %s98
      %p107 = scmp.eq.s32.totalorder %s19, 0
      %p108 = por %p106, %p107
      %p109 = scmp.ne.s32.totalorder %s97, %s98
      %p110 = scmp.eq.s32.totalorder %s20, 1
      %p111 = por %p109, %p110
      %p113 = scmp.ne.s32.totalorder %s98, %s112
      %p114 = scmp.eq.s32.totalorder %s20, 0
      %p115 = por %p113, %p114
      %s117 = sadd.s32 %s116, 1
      %p120 = scmp.eq.s32.totalorder %s14, 1
      %p121 = scmp.ne.s32.totalorder %s116, %s118
      %p122 = scmp.eq.s32.totalorder %s14, 0
      %p123 = por %p121, %p122
      %p124 = scmp.ne.s32.totalorder %s116, %s118
      %p125 = scmp.eq.s32.totalorder %s19, 1
      %p126 = por %p124, %p125
      %p127 = scmp.ne.s32.totalorder %s118, %s119
      %p128 = scmp.eq.s32.totalorder %s19, 0
      %p129 = por %p127, %p128
      %p130 = scmp.ne.s32.totalorder %s118, %s119
      %p131 = scmp.eq.s32.totalorder %s20, 1
      %p132 = por %p130, %p131
      %p134 = scmp.ne.s32.totalorder %s119, %s133
      %p135 = scmp.eq.s32.totalorder %s20, 0
      %p136 = por %p134, %p135
      %s137 = ssub.s32 %s14, %s21
      %p138 = scmp.eq.s32.totalorder %s137, 0
      %s140 = sadd.s32 %s139, 1
      %s141 = scalar_select %p138, %s139, %s140
      %p144 = pneg %p138
      %p145 = scmp.eq.s32.totalorder %s14, 1
      %p146 = por %p144, %p145
      %p147 = scmp.ne.s32.totalorder %s139, %s142
      %p148 = scmp.eq.s32.totalorder %s14, 0
      %p149 = por %p147, %p148
      %p150 = scmp.ne.s32.totalorder %s139, %s142
      %p151 = scmp.eq.s32.totalorder %s19, 1
      %p152 = por %p150, %p151
      %p153 = scmp.ne.s32.totalorder %s142, %s143
      %p154 = scmp.eq.s32.totalorder %s19, 0
      %p155 = por %p153, %p154
      %p156 = scmp.ne.s32.totalorder %s142, %s143
      %p157 = scmp.eq.s32.totalorder %s20, 1
      %p158 = por %p156, %p157
      %p160 = scmp.ne.s32.totalorder %s143, %s159
      %p161 = scmp.eq.s32.totalorder %s20, 0
      %p162 = por %p160, %p161
      %p163 = scmp.le.s32.totalorder 1, %s14
      %p164 = scmp.lt.s32.totalorder %s14, 3
      %p165 = pnand %p163, %p164
      %p166 = pneg %p165
      // Predicated region
      $region9: #{tpu_custom_call.1} parent=5 // pred_check
        _
      $region10: #{tpu_custom_call.1} parent=5 // pred_check_branch
        %168 = sbr.rel (%p165) target = $region12
      $region11: #{tpu_custom_call.1} parent=5 // pred_region
        %s169 = ssub.s32 %s14, 1
        // Predicated region
        $region13: #{tpu_custom_call.1} parent=11 // pred_check
          %p170 = pneg %p87
        $region14: #{tpu_custom_call.1} parent=11 // pred_check_branch
          %172 = sbr.rel (%p170) target = $region16
        $region15: #{tpu_custom_call.1} parent=11 // pred_region
          _
        $region16: #{tpu_custom_call.1} parent=11 // pred_fallthru
          _
        // Predicated region
        $region17: #{tpu_custom_call.1} parent=11 // pred_check
          %p173 = pneg %p108
        $region18: #{tpu_custom_call.1} parent=11 // pred_check_branch
          %175 = sbr.rel (%p173) target = $region20
        $region19: #{tpu_custom_call.1} parent=11 // pred_region
          _
        $region20: #{tpu_custom_call.1} parent=11 // pred_fallthru
          _
        // Predicated region
        $region21: #{tpu_custom_call.1} parent=11 // pred_check
          %p176 = pneg %p129
        $region22: #{tpu_custom_call.1} parent=11 // pred_check_branch
          %178 = sbr.rel (%p176) target = $region24
        $region23: #{tpu_custom_call.1} parent=11 // pred_region
          _
        $region24: #{tpu_custom_call.1} parent=11 // pred_fallthru
          _
      $region12: #{tpu_custom_call.1} parent=5 // pred_fallthru
        _
      %p179 = scmp.lt.s32.totalorder %s14, 2
      // Predicated region
      $region25: #{tpu_custom_call.1} parent=5 // pred_check
        %p180 = pneg %p179
      $region26: #{tpu_custom_call.1} parent=5 // pred_check_branch
        %182 = sbr.rel (%p180) target = $region28
      $region27: #{tpu_custom_call.1} parent=5 // pred_region
        // Predicated region
        $region29: #{tpu_custom_call.1} parent=27 // pred_check
          %p183 = pneg %p34
        $region30: #{tpu_custom_call.1} parent=27 // pred_check_branch
          %185 = sbr.rel (%p183) target = $region32
        $region31: #{tpu_custom_call.1} parent=27 // pred_region
          %p186 = scmp.lt.s32.totalorder %s14, 1
          %s187 = scalar_select %p186, %s14, 1
          %s188 = smul.addr %s187, 4
          %s189 = scalar_lea.vmem %s0, %s188
        $region32: #{tpu_custom_call.1} parent=27 // pred_fallthru
          _
        // Predicated region
        $region33: #{tpu_custom_call.1} parent=27 // pred_check
          %p190 = pneg %p60
        $region34: #{tpu_custom_call.1} parent=27 // pred_check_branch
          %192 = sbr.rel (%p190) target = $region36
        $region35: #{tpu_custom_call.1} parent=27 // pred_region
          %p193 = scmp.lt.s32.totalorder %s14, 1
          %s194 = scalar_select %p193, %s14, 1
          %s195 = smul.addr %s194, 4
          %s196 = smul.addr %s195, 4
          %s197 = scalar_lea.vmem %s1, %s196
        $region36: #{tpu_custom_call.1} parent=27 // pred_fallthru
          _
      $region28: #{tpu_custom_call.1} parent=5 // pred_fallthru
        _
      %p198 = scmp.le.s32.totalorder 1, %s14
      %p199 = scmp.lt.s32.totalorder %s14, 3
      %p200 = pnand %p198, %p199
      %p201 = pneg %p200
      // Predicated region
      $region37: #{tpu_custom_call.1} parent=5 // pred_check
        _
      $region38: #{tpu_custom_call.1} parent=5 // pred_check_branch
        %203 = sbr.rel (%p200) target = $region40
      $region39: #{tpu_custom_call.1} parent=5 // pred_region
        %s204 = ssub.s32 %s14, 1
        %p205 = scmp.lt.s32.totalorder %s19, 1
        %s206 = scalar_select %p205, %s19, 1
        %s207 = smul.addr %s206, 4
        %s208 = scalar_lea.vmem %s0, %s207
        %p209 = pneg %p40
        %p210 = pneg %p37
        %p211 = scmp.lt.s32.totalorder %s19, 1
        %s212 = scalar_select %p211, %s19, 1
        %s213 = smul.addr %s212, 4
        %s214 = smul.addr %s213, 4
        %s215 = scalar_lea.vmem %s1, %s214
        %p216 = pneg %p66
        %p217 = pneg %p63
        %p218 = pneg %p87
        %p219 = pneg %p84
        %p220 = pneg %p108
        %p221 = pneg %p105
        %p222 = pneg %p129
        %p223 = pneg %p126
        %p224 = pneg %p155
        %p225 = pneg %p152
        %s226 = sand.u32 %s142, 1
        %s227 = scalar_lea.sflag [#allocation3], %s226
        %s228 = sand.u32 %s142, 1
        %s229 = smul.addr %s228, 16
        %s230 = scalar_lea.vmem [#allocation2], %s229
        %p231 = scmp.lt.s32.totalorder %s19, 1
        %s232 = scalar_select %p231, %s19, 1
        %s233 = smul.addr %s232, 4
        %s234 = scalar_lea.vmem %s0, %s233
        %p235 = scmp.lt.s32.totalorder %s19, 1
        %s236 = scalar_select %p235, %s19, 1
        %s237 = smul.addr %s236, 4
        %s238 = smul.addr %s237, 4
        %s239 = scalar_lea.vmem %s1, %s238
        %v240 = vld [vmem:[%s234] sm:$0xf]
        %v241 = vld [vmem:[%s239] sm:$0xff]
        %v242 = vld [vmem:[%s239 + $0x8] sm:$0xff]
        %v243 = vld [vmem:[%s2] sm:$0xff]
        %v244 = vld [vmem:[%s2 + $0x8] sm:$0xff]
        %v245 = vld [vmem:[%s3] sm:$0xff]
        %v246 = vld [vmem:[%s3 + $0x8] sm:$0xff]
        %v247 = vld [vmem:[%s3 + $0x10] sm:$0xff]
        %v248 = vld [vmem:[%s3 + $0x18] sm:$0xff]
        %v249 = vld [vmem:[%s3 + $0x20] sm:$0xff]
        %v250 = vld [vmem:[%s3 + $0x28] sm:$0xff]
        %v251 = vld [vmem:[%s3 + $0x30] sm:$0xff]
        %v252 = vld [vmem:[%s3 + $0x38] sm:$0xff]
        %v253 = vld [vmem:[%s4] sm:$0xff]
        %v254 = vld [vmem:[%s4 + $0x8] sm:$0xff]
        %v255 = vld [vmem:[%s4 + $0x10] sm:$0xff]
        %v256 = vld [vmem:[%s4 + $0x18] sm:$0xff]
        %v257 = vld [vmem:[%s4 + $0x20] sm:$0xff]
        %v258 = vld [vmem:[%s4 + $0x28] sm:$0xff]
        %v259 = vlaneseq
        %v260 = vshrl.u32 %v259, 7
        %v261 = vadd.s32 %v260, 8
        %v262 = vadd.s32 %v260, 16
        %v263 = vadd.s32 %v260, 24
        %v264 = vadd.s32 %v260, 32
        %v265 = vadd.s32 %v260, 40
        %v266 = vadd.s32 %v260, 48
        %v267 = vadd.s32 %v260, 56
        %v268 = vlaneseq
        %v269 = vshrl.u32 %v268, 7
        %v270 = vsub.s32 0, %v269
        %v271 = vrot.slane %v240, %v270
        %v272 = vlaneseq
        %v273 = vshrl.u32 %v272, 7
        %v274 = vsub.s32 1, %v273
        %v275 = vrot.slane %v240, %v274
        %v276 = vlaneseq
        %v277 = vshrl.u32 %v276, 7
        %v278 = vsub.s32 2, %v277
        %v279 = vrot.slane %v240, %v278
        %v280 = vlaneseq
        %v281 = vshrl.u32 %v280, 7
        %v282 = vsub.s32 3, %v281
        %v283 = vrot.slane %v240, %v282
        %vm284 = vcmp.eq.s32.totalorder %v260, %v271
        %vm285 = vcmp.eq.s32.totalorder %v260, %v275
        %vm286 = vcmp.eq.s32.totalorder %v260, %v279
        %vm287 = vcmp.eq.s32.totalorder %v260, %v283
        %vm288 = vcmp.eq.s32.totalorder %v261, %v271
        %vm289 = vcmp.eq.s32.totalorder %v261, %v275
        %vm290 = vcmp.eq.s32.totalorder %v261, %v279
        %vm291 = vcmp.eq.s32.totalorder %v261, %v283
        %vm292 = vcmp.eq.s32.totalorder %v262, %v271
        %vm293 = vcmp.eq.s32.totalorder %v262, %v275
        %vm294 = vcmp.eq.s32.totalorder %v262, %v279
        %vm295 = vcmp.eq.s32.totalorder %v262, %v283
        %vm296 = vcmp.eq.s32.totalorder %v263, %v271
        %vm297 = vcmp.eq.s32.totalorder %v263, %v275
        %vm298 = vcmp.eq.s32.totalorder %v263, %v279
        %vm299 = vcmp.eq.s32.totalorder %v263, %v283
        %vm300 = vcmp.eq.s32.totalorder %v264, %v271
        %vm301 = vcmp.eq.s32.totalorder %v264, %v275
        %vm302 = vcmp.eq.s32.totalorder %v264, %v279
        %vm303 = vcmp.eq.s32.totalorder %v264, %v283
        %vm304 = vcmp.eq.s32.totalorder %v265, %v271
        %vm305 = vcmp.eq.s32.totalorder %v265, %v275
        %vm306 = vcmp.eq.s32.totalorder %v265, %v279
        %vm307 = vcmp.eq.s32.totalorder %v265, %v283
        %vm308 = vcmp.eq.s32.totalorder %v266, %v271
        %vm309 = vcmp.eq.s32.totalorder %v266, %v275
        %vm310 = vcmp.eq.s32.totalorder %v266, %v279
        %vm311 = vcmp.eq.s32.totalorder %v266, %v283
        %vm312 = vcmp.eq.s32.totalorder %v267, %v271
        %vm313 = vcmp.eq.s32.totalorder %v267, %v275
        %vm314 = vcmp.eq.s32.totalorder %v267, %v279
        %vm315 = vcmp.eq.s32.totalorder %v267, %v283
        %v316 = vsel %vm284, 1, 0
        %v317 = vsel %vm285, 1, 0
        %v318 = vsel %vm286, 1, 0
        %v319 = vsel %vm287, 1, 0
        %v320 = vsel %vm288, 1, 0
        %v321 = vsel %vm289, 1, 0
        %v322 = vsel %vm290, 1, 0
        %v323 = vsel %vm291, 1, 0
        %v324 = vsel %vm292, 1, 0
        %v325 = vsel %vm293, 1, 0
        %v326 = vsel %vm294, 1, 0
        %v327 = vsel %vm295, 1, 0
        %v328 = vsel %vm296, 1, 0
        %v329 = vsel %vm297, 1, 0
        %v330 = vsel %vm298, 1, 0
        %v331 = vsel %vm299, 1, 0
        %v332 = vsel %vm300, 1, 0
        %v333 = vsel %vm301, 1, 0
        %v334 = vsel %vm302, 1, 0
        %v335 = vsel %vm303, 1, 0
        %v336 = vsel %vm304, 1, 0
        %v337 = vsel %vm305, 1, 0
        %v338 = vsel %vm306, 1, 0
        %v339 = vsel %vm307, 1, 0
        %v340 = vsel %vm308, 1, 0
        %v341 = vsel %vm309, 1, 0
        %v342 = vsel %vm310, 1, 0
        %v343 = vsel %vm311, 1, 0
        %v344 = vsel %vm312, 1, 0
        %v345 = vsel %vm313, 1, 0
        %v346 = vsel %vm314, 1, 0
        %v347 = vsel %vm315, 1, 0
        %v348 = vcvt.s32.f32 %v316
        %v349 = vcvt.s32.f32 %v317
        %v350 = vcvt.s32.f32 %v318
        %v351 = vcvt.s32.f32 %v319
        %v352 = vcvt.s32.f32 %v320
        %v353 = vcvt.s32.f32 %v321
        %v354 = vcvt.s32.f32 %v322
        %v355 = vcvt.s32.f32 %v323
        %v356 = vcvt.s32.f32 %v324
        %v357 = vcvt.s32.f32 %v325
        %v358 = vcvt.s32.f32 %v326
        %v359 = vcvt.s32.f32 %v327
        %v360 = vcvt.s32.f32 %v328
        %v361 = vcvt.s32.f32 %v329
        %v362 = vcvt.s32.f32 %v330
        %v363 = vcvt.s32.f32 %v331
        %v364 = vcvt.s32.f32 %v332
        %v365 = vcvt.s32.f32 %v333
        %v366 = vcvt.s32.f32 %v334
        %v367 = vcvt.s32.f32 %v335
        %v368 = vcvt.s32.f32 %v336
        %v369 = vcvt.s32.f32 %v337
        %v370 = vcvt.s32.f32 %v338
        %v371 = vcvt.s32.f32 %v339
        %v372 = vcvt.s32.f32 %v340
        %v373 = vcvt.s32.f32 %v341
        %v374 = vcvt.s32.f32 %v342
        %v375 = vcvt.s32.f32 %v343
        %v376 = vcvt.s32.f32 %v344
        %v377 = vcvt.s32.f32 %v345
        %v378 = vcvt.s32.f32 %v346
        %v379 = vcvt.s32.f32 %v347
        %vm380 = vcmask 523264
        %v382 = vsel %vm380, %v243, 0
        %v385 = vsel %vm380, %v244, 0
        %387 = vmatprep.subr.mxu0 0.0
        %388 = vmatpush1.msra.mxu0 0.0
        %389 = vmatprep.subr.mxu0 0.0
        %390 = vmatpush1.msra.mxu0 0.0
        %391 = vmatprep.subr.mxu0 0.0
        %392 = vmatpush1.msra.mxu0 0.0
        %393 = vmatprep.subr.mxu0 0.0
        %394 = vmatpush1.msra.mxu0 0.0
        %395 = vmatprep.subr.mxu0 0.0
        %396 = vmatpush1.msra.mxu0 0.0
        %397 = vmatprep.subr.mxu0 0.0
        %398 = vmatpush1.msra.mxu0 0.0
        %399 = vmatprep.subr.mxu0 0.0
        %400 = vmatpush1.msra.mxu0 0.0
        %401 = vmatprep.subr.mxu0 0.0
        %402 = vmatpush1.msra.mxu0 0.0
        %403 = vmatprep.subr.mxu0 %v377
        %404 = vmatpush1.msra.mxu0 %v376
        %405 = vmatprep.subr.mxu0 %v373
        %406 = vmatpush1.msra.mxu0 %v372
        %407 = vmatprep.subr.mxu0 %v369
        %408 = vmatpush1.msra.mxu0 %v368
        %409 = vmatprep.subr.mxu0 %v365
        %410 = vmatpush1.msra.mxu0 %v364
        %411 = vmatprep.subr.mxu0 %v361
        %412 = vmatpush1.msra.mxu0 %v360
        %413 = vmatprep.subr.mxu0 %v357
        %414 = vmatpush1.msra.mxu0 %v356
        %415 = vmatprep.subr.mxu0 %v353
        %416 = vmatpush1.msra.mxu0 %v352
        %417 = vmatprep.subr.mxu0 %v349
        %418 = vmatpush1.msra.mxu0 %v348
        %419 = vmatprep.subr.mxu0 0.0
        %420 = vmatpush2.msra.mxu0 0.0
        %421 = vmatprep.subr.mxu0 0.0
        %422 = vmatpush2.msra.mxu0 0.0
        %423 = vmatprep.subr.mxu0 0.0
        %424 = vmatpush2.msra.mxu0 0.0
        %425 = vmatprep.subr.mxu0 0.0
        %426 = vmatpush2.msra.mxu0 0.0
        %427 = vmatprep.subr.mxu0 0.0
        %428 = vmatpush2.msra.mxu0 0.0
        %429 = vmatprep.subr.mxu0 0.0
        %430 = vmatpush2.msra.mxu0 0.0
        %431 = vmatprep.subr.mxu0 0.0
        %432 = vmatpush2.msra.mxu0 0.0
        %433 = vmatprep.subr.mxu0 0.0
        %434 = vmatpush2.msra.mxu0 0.0
        %435 = vmatprep.subr.mxu0 0.0
        %436 = vmatpush2.msra.mxu0 0.0
        %437 = vmatprep.subr.mxu0 0.0
        %438 = vmatpush2.msra.mxu0 0.0
        %439 = vmatprep.subr.mxu0 0.0
        %440 = vmatpush2.msra.mxu0 0.0
        %441 = vmatprep.subr.mxu0 0.0
        %442 = vmatpush2.msra.mxu0 0.0
        %443 = vmatprep.subr.mxu0 0.0
        %444 = vmatpush2.msra.mxu0 0.0
        %445 = vmatprep.subr.mxu0 0.0
        %446 = vmatpush2.msra.mxu0 0.0
        %447 = vmatprep.subr.mxu0 0.0
        %448 = vmatpush2.msra.mxu0 0.0
        %449 = vmatprep.subr.mxu0 0.0
        %450 = vmatpush2.msra.mxu0 0.0
        %451 = vmatprep.mubr.f32.mxu0 0.0
        %452 = vmatmul.mubr.f32.gmra.mxu0 %v382
        %v453 = vpop.f32.mrf.mxu0
        %v454 = vadd.f32 0.0, %v453
        %v455 = vpop.f32.mrf.mxu0
        %v456 = vadd.f32 0.0, %v455
        %457 = vmatprep.mubr.f32.mxu0 0.0
        %458 = vmatmul.mubr.f32.gmra.mxu0 %v385
        %v459 = vpop.f32.mrf.mxu0
        %v460 = vadd.f32 0.0, %v459
        %v461 = vpop.f32.mrf.mxu0
        %v462 = vadd.f32 0.0, %v461
        %463 = vdwg.mxu0
        %464 = vmatprep.subr.mxu0 0.0
        %465 = vmatpush1.msra.mxu0 0.0
        %466 = vmatprep.subr.mxu0 0.0
        %467 = vmatpush1.msra.mxu0 0.0
        %468 = vmatprep.subr.mxu0 0.0
        %469 = vmatpush1.msra.mxu0 0.0
        %470 = vmatprep.subr.mxu0 0.0
        %471 = vmatpush1.msra.mxu0 0.0
        %472 = vmatprep.subr.mxu0 0.0
        %473 = vmatpush1.msra.mxu0 0.0
        %474 = vmatprep.subr.mxu0 0.0
        %475 = vmatpush1.msra.mxu0 0.0
        %476 = vmatprep.subr.mxu0 0.0
        %477 = vmatpush1.msra.mxu0 0.0
        %478 = vmatprep.subr.mxu0 0.0
        %479 = vmatpush1.msra.mxu0 0.0
        %480 = vmatprep.subr.mxu0 %v379
        %481 = vmatpush1.msra.mxu0 %v378
        %482 = vmatprep.subr.mxu0 %v375
        %483 = vmatpush1.msra.mxu0 %v374
        %484 = vmatprep.subr.mxu0 %v371
        %485 = vmatpush1.msra.mxu0 %v370
        %486 = vmatprep.subr.mxu0 %v367
        %487 = vmatpush1.msra.mxu0 %v366
        %488 = vmatprep.subr.mxu0 %v363
        %489 = vmatpush1.msra.mxu0 %v362
        %490 = vmatprep.subr.mxu0 %v359
        %491 = vmatpush1.msra.mxu0 %v358
        %492 = vmatprep.subr.mxu0 %v355
        %493 = vmatpush1.msra.mxu0 %v354
        %494 = vmatprep.subr.mxu0 %v351
        %495 = vmatpush1.msra.mxu0 %v350
        %496 = vmatprep.subr.mxu0 0.0
        %497 = vmatpush2.msra.mxu0 0.0
        %498 = vmatprep.subr.mxu0 0.0
        %499 = vmatpush2.msra.mxu0 0.0
        %500 = vmatprep.subr.mxu0 0.0
        %501 = vmatpush2.msra.mxu0 0.0
        %502 = vmatprep.subr.mxu0 0.0
        %503 = vmatpush2.msra.mxu0 0.0
        %504 = vmatprep.subr.mxu0 0.0
        %505 = vmatpush2.msra.mxu0 0.0
        %506 = vmatprep.subr.mxu0 0.0
        %507 = vmatpush2.msra.mxu0 0.0
        %508 = vmatprep.subr.mxu0 0.0
        %509 = vmatpush2.msra.mxu0 0.0
        %510 = vmatprep.subr.mxu0 0.0
        %511 = vmatpush2.msra.mxu0 0.0
        %512 = vmatprep.subr.mxu0 0.0
        %513 = vmatpush2.msra.mxu0 0.0
        %514 = vmatprep.subr.mxu0 0.0
        %515 = vmatpush2.msra.mxu0 0.0
        %516 = vmatprep.subr.mxu0 0.0
        %517 = vmatpush2.msra.mxu0 0.0
        %518 = vmatprep.subr.mxu0 0.0
        %519 = vmatpush2.msra.mxu0 0.0
        %520 = vmatprep.subr.mxu0 0.0
        %521 = vmatpush2.msra.mxu0 0.0
        %522 = vmatprep.subr.mxu0 0.0
        %523 = vmatpush2.msra.mxu0 0.0
        %524 = vmatprep.subr.mxu0 0.0
        %525 = vmatpush2.msra.mxu0 0.0
        %526 = vmatprep.subr.mxu0 0.0
        %527 = vmatpush2.msra.mxu0 0.0
        %528 = vmatprep.mubr.f32.mxu0 0.0
        %529 = vmatmul.mubr.f32.gmra.mxu0 %v382
        %v530 = vpop.f32.mrf.mxu0
        %v531 = vadd.f32 0.0, %v530
        %v532 = vpop.f32.mrf.mxu0
        %v533 = vadd.f32 0.0, %v532
        %534 = vmatprep.mubr.f32.mxu0 0.0
        %535 = vmatmul.mubr.f32.gmra.mxu0 %v385
        %v536 = vpop.f32.mrf.mxu0
        %v537 = vadd.f32 0.0, %v536
        %v538 = vpop.f32.mrf.mxu0
        %v539 = vadd.f32 0.0, %v538
        %540 = vdwg.mxu0
        %v541 = vunpack.c.l.bf16 %v241
        %v542 = vunpack.c.h.bf16 %v241
        %v543 = vunpack.c.l.bf16 %v242
        %v544 = vunpack.c.h.bf16 %v242
        %vm545 = vcmask 64512
        %v547 = vsel %vm545, %v245, 0
        %v550 = vsel %vm545, %v246, 0
        %v553 = vsel %vm545, %v247, 0
        %v556 = vsel %vm545, %v248, 0
        %v559 = vsel %vm545, %v249, 0
        %v562 = vsel %vm545, %v250, 0
        %v565 = vsel %vm545, %v251, 0
        %v568 = vsel %vm545, %v252, 0
        %570 = vmatprep.subr.mxu0 0.0
        %571 = vmatpush1.msra.mxu0 0.0
        %572 = vmatprep.subr.mxu0 0.0
        %573 = vmatpush1.msra.mxu0 0.0
        %574 = vmatprep.subr.mxu0 0.0
        %575 = vmatpush1.msra.mxu0 0.0
        %576 = vmatprep.subr.mxu0 0.0
        %577 = vmatpush1.msra.mxu0 0.0
        %578 = vmatprep.subr.mxu0 0.0
        %579 = vmatpush1.msra.mxu0 0.0
        %580 = vmatprep.subr.mxu0 0.0
        %581 = vmatpush1.msra.mxu0 0.0
        %582 = vmatprep.subr.mxu0 0.0
        %583 = vmatpush1.msra.mxu0 0.0
        %584 = vmatprep.subr.mxu0 0.0
        %585 = vmatpush1.msra.mxu0 0.0
        %586 = vmatprep.subr.mxu0 0.0
        %587 = vmatpush1.msra.mxu0 0.0
        %588 = vmatprep.subr.mxu0 0.0
        %589 = vmatpush1.msra.mxu0 0.0
        %590 = vmatprep.subr.mxu0 0.0
        %591 = vmatpush1.msra.mxu0 0.0
        %592 = vmatprep.subr.mxu0 0.0
        %593 = vmatpush1.msra.mxu0 0.0
        %594 = vmatprep.subr.mxu0 0.0
        %595 = vmatpush1.msra.mxu0 0.0
        %596 = vmatprep.subr.mxu0 0.0
        %597 = vmatpush1.msra.mxu0 0.0
        %598 = vmatprep.subr.mxu0 0.0
        %599 = vmatpush1.msra.mxu0 0.0
        %600 = vmatprep.subr.mxu0 %v542
        %601 = vmatpush1.msra.mxu0 %v541
        %602 = vmatprep.subr.mxu0 0.0
        %603 = vmatpush2.msra.mxu0 0.0
        %604 = vmatprep.subr.mxu0 0.0
        %605 = vmatpush2.msra.mxu0 0.0
        %606 = vmatprep.subr.mxu0 0.0
        %607 = vmatpush2.msra.mxu0 0.0
        %608 = vmatprep.subr.mxu0 0.0
        %609 = vmatpush2.msra.mxu0 0.0
        %610 = vmatprep.subr.mxu0 0.0
        %611 = vmatpush2.msra.mxu0 0.0
        %612 = vmatprep.subr.mxu0 0.0
        %613 = vmatpush2.msra.mxu0 0.0
        %614 = vmatprep.subr.mxu0 0.0
        %615 = vmatpush2.msra.mxu0 0.0
        %616 = vmatprep.subr.mxu0 0.0
        %617 = vmatpush2.msra.mxu0 0.0
        %618 = vmatprep.subr.mxu0 0.0
        %619 = vmatpush2.msra.mxu0 0.0
        %620 = vmatprep.subr.mxu0 0.0
        %621 = vmatpush2.msra.mxu0 0.0
        %622 = vmatprep.subr.mxu0 0.0
        %623 = vmatpush2.msra.mxu0 0.0
        %624 = vmatprep.subr.mxu0 0.0
        %625 = vmatpush2.msra.mxu0 0.0
        %626 = vmatprep.subr.mxu0 0.0
        %627 = vmatpush2.msra.mxu0 0.0
        %628 = vmatprep.subr.mxu0 0.0
        %629 = vmatpush2.msra.mxu0 0.0
        %630 = vmatprep.subr.mxu0 0.0
        %631 = vmatpush2.msra.mxu0 0.0
        %632 = vmatprep.subr.mxu0 0.0
        %633 = vmatpush2.msra.mxu0 0.0
        %634 = vmatprep.mubr.f32.mxu0 0.0
        %635 = vmatmul.mubr.f32.gmra.mxu0 %v547
        %v636 = vpop.f32.mrf.mxu0
        %v637 = vadd.f32 0.0, %v636
        %v638 = vpop.f32.mrf.mxu0
        %v639 = vadd.f32 0.0, %v638
        %640 = vmatprep.mubr.f32.mxu0 0.0
        %641 = vmatmul.mubr.f32.gmra.mxu0 %v550
        %v642 = vpop.f32.mrf.mxu0
        %v643 = vadd.f32 0.0, %v642
        %v644 = vpop.f32.mrf.mxu0
        %v645 = vadd.f32 0.0, %v644
        %646 = vmatprep.mubr.f32.mxu0 0.0
        %647 = vmatmul.mubr.f32.gmra.mxu0 %v553
        %v648 = vpop.f32.mrf.mxu0
        %v649 = vadd.f32 0.0, %v648
        %v650 = vpop.f32.mrf.mxu0
        %v651 = vadd.f32 0.0, %v650
        %652 = vmatprep.mubr.f32.mxu0 0.0
        %653 = vmatmul.mubr.f32.gmra.mxu0 %v556
        %v654 = vpop.f32.mrf.mxu0
        %v655 = vadd.f32 0.0, %v654
        %v656 = vpop.f32.mrf.mxu0
        %v657 = vadd.f32 0.0, %v656
        %658 = vmatprep.mubr.f32.mxu0 0.0
        %659 = vmatmul.mubr.f32.gmra.mxu0 %v559
        %v660 = vpop.f32.mrf.mxu0
        %v661 = vadd.f32 0.0, %v660
        %v662 = vpop.f32.mrf.mxu0
        %v663 = vadd.f32 0.0, %v662
        %664 = vmatprep.mubr.f32.mxu0 0.0
        %665 = vmatmul.mubr.f32.gmra.mxu0 %v562
        %v666 = vpop.f32.mrf.mxu0
        %v667 = vadd.f32 0.0, %v666
        %v668 = vpop.f32.mrf.mxu0
        %v669 = vadd.f32 0.0, %v668
        %670 = vmatprep.mubr.f32.mxu0 0.0
        %671 = vmatmul.mubr.f32.gmra.mxu0 %v565
        %v672 = vpop.f32.mrf.mxu0
        %v673 = vadd.f32 0.0, %v672
        %v674 = vpop.f32.mrf.mxu0
        %v675 = vadd.f32 0.0, %v674
        %676 = vmatprep.mubr.f32.mxu0 0.0
        %677 = vmatmul.mubr.f32.gmra.mxu0 %v568
        %v678 = vpop.f32.mrf.mxu0
        %v679 = vadd.f32 0.0, %v678
        %v680 = vpop.f32.mrf.mxu0
        %v681 = vadd.f32 0.0, %v680
        %682 = vdwg.mxu0
        %683 = vmatprep.subr.mxu0 0.0
        %684 = vmatpush1.msra.mxu0 0.0
        %685 = vmatprep.subr.mxu0 0.0
        %686 = vmatpush1.msra.mxu0 0.0
        %687 = vmatprep.subr.mxu0 0.0
        %688 = vmatpush1.msra.mxu0 0.0
        %689 = vmatprep.subr.mxu0 0.0
        %690 = vmatpush1.msra.mxu0 0.0
        %691 = vmatprep.subr.mxu0 0.0
        %692 = vmatpush1.msra.mxu0 0.0
        %693 = vmatprep.subr.mxu0 0.0
        %694 = vmatpush1.msra.mxu0 0.0
        %695 = vmatprep.subr.mxu0 0.0
        %696 = vmatpush1.msra.mxu0 0.0
        %697 = vmatprep.subr.mxu0 0.0
        %698 = vmatpush1.msra.mxu0 0.0
        %699 = vmatprep.subr.mxu0 0.0
        %700 = vmatpush1.msra.mxu0 0.0
        %701 = vmatprep.subr.mxu0 0.0
        %702 = vmatpush1.msra.mxu0 0.0
        %703 = vmatprep.subr.mxu0 0.0
        %704 = vmatpush1.msra.mxu0 0.0
        %705 = vmatprep.subr.mxu0 0.0
        %706 = vmatpush1.msra.mxu0 0.0
        %707 = vmatprep.subr.mxu0 0.0
        %708 = vmatpush1.msra.mxu0 0.0
        %709 = vmatprep.subr.mxu0 0.0
        %710 = vmatpush1.msra.mxu0 0.0
        %711 = vmatprep.subr.mxu0 0.0
        %712 = vmatpush1.msra.mxu0 0.0
        %713 = vmatprep.subr.mxu0 %v544
        %714 = vmatpush1.msra.mxu0 %v543
        %715 = vmatprep.subr.mxu0 0.0
        %716 = vmatpush2.msra.mxu0 0.0
        %717 = vmatprep.subr.mxu0 0.0
        %718 = vmatpush2.msra.mxu0 0.0
        %719 = vmatprep.subr.mxu0 0.0
        %720 = vmatpush2.msra.mxu0 0.0
        %721 = vmatprep.subr.mxu0 0.0
        %722 = vmatpush2.msra.mxu0 0.0
        %723 = vmatprep.subr.mxu0 0.0
        %724 = vmatpush2.msra.mxu0 0.0
        %725 = vmatprep.subr.mxu0 0.0
        %726 = vmatpush2.msra.mxu0 0.0
        %727 = vmatprep.subr.mxu0 0.0
        %728 = vmatpush2.msra.mxu0 0.0
        %729 = vmatprep.subr.mxu0 0.0
        %730 = vmatpush2.msra.mxu0 0.0
        %731 = vmatprep.subr.mxu0 0.0
        %732 = vmatpush2.msra.mxu0 0.0
        %733 = vmatprep.subr.mxu0 0.0
        %734 = vmatpush2.msra.mxu0 0.0
        %735 = vmatprep.subr.mxu0 0.0
        %736 = vmatpush2.msra.mxu0 0.0
        %737 = vmatprep.subr.mxu0 0.0
        %738 = vmatpush2.msra.mxu0 0.0
        %739 = vmatprep.subr.mxu0 0.0
        %740 = vmatpush2.msra.mxu0 0.0
        %741 = vmatprep.subr.mxu0 0.0
        %742 = vmatpush2.msra.mxu0 0.0
        %743 = vmatprep.subr.mxu0 0.0
        %744 = vmatpush2.msra.mxu0 0.0
        %745 = vmatprep.subr.mxu0 0.0
        %746 = vmatpush2.msra.mxu0 0.0
        %747 = vmatprep.mubr.f32.mxu0 0.0
        %748 = vmatmul.mubr.f32.gmra.mxu0 %v547
        %v749 = vpop.f32.mrf.mxu0
        %v750 = vadd.f32 0.0, %v749
        %v751 = vpop.f32.mrf.mxu0
        %v752 = vadd.f32 0.0, %v751
        %753 = vmatprep.mubr.f32.mxu0 0.0
        %754 = vmatmul.mubr.f32.gmra.mxu0 %v550
        %v755 = vpop.f32.mrf.mxu0
        %v756 = vadd.f32 0.0, %v755
        %v757 = vpop.f32.mrf.mxu0
        %v758 = vadd.f32 0.0, %v757
        %759 = vmatprep.mubr.f32.mxu0 0.0
        %760 = vmatmul.mubr.f32.gmra.mxu0 %v553
        %v761 = vpop.f32.mrf.mxu0
        %v762 = vadd.f32 0.0, %v761
        %v763 = vpop.f32.mrf.mxu0
        %v764 = vadd.f32 0.0, %v763
        %765 = vmatprep.mubr.f32.mxu0 0.0
        %766 = vmatmul.mubr.f32.gmra.mxu0 %v556
        %v767 = vpop.f32.mrf.mxu0
        %v768 = vadd.f32 0.0, %v767
        %v769 = vpop.f32.mrf.mxu0
        %v770 = vadd.f32 0.0, %v769
        %771 = vmatprep.mubr.f32.mxu0 0.0
        %772 = vmatmul.mubr.f32.gmra.mxu0 %v559
        %v773 = vpop.f32.mrf.mxu0
        %v774 = vadd.f32 0.0, %v773
        %v775 = vpop.f32.mrf.mxu0
        %v776 = vadd.f32 0.0, %v775
        %777 = vmatprep.mubr.f32.mxu0 0.0
        %778 = vmatmul.mubr.f32.gmra.mxu0 %v562
        %v779 = vpop.f32.mrf.mxu0
        %v780 = vadd.f32 0.0, %v779
        %v781 = vpop.f32.mrf.mxu0
        %v782 = vadd.f32 0.0, %v781
        %783 = vmatprep.mubr.f32.mxu0 0.0
        %784 = vmatmul.mubr.f32.gmra.mxu0 %v565
        %v785 = vpop.f32.mrf.mxu0
        %v786 = vadd.f32 0.0, %v785
        %v787 = vpop.f32.mrf.mxu0
        %v788 = vadd.f32 0.0, %v787
        %789 = vmatprep.mubr.f32.mxu0 0.0
        %790 = vmatmul.mubr.f32.gmra.mxu0 %v568
        %v791 = vpop.f32.mrf.mxu0
        %v792 = vadd.f32 0.0, %v791
        %v793 = vpop.f32.mrf.mxu0
        %v794 = vadd.f32 0.0, %v793
        %795 = vdwg.mxu0
        %797 = vset.pattern.permute.xlu0 0
        %798 = vperm.xlu0 %797, %v257
        %v799 = vpop.permute.xlu0 %798
        %802 = vset.pattern.permute.xlu0 0
        %803 = vperm.xlu0 %802, %v258
        %v804 = vpop.permute.xlu0 %803
        %806 = vset.pattern.permute.xlu0 1
        %807 = vperm.xlu0 %806, %v257
        %v808 = vpop.permute.xlu0 %807
        %810 = vset.pattern.permute.xlu0 1
        %811 = vperm.xlu0 %810, %v258
        %v812 = vpop.permute.xlu0 %811
        %v814 = vadd.f32 %v533, %v637
        %v815 = vadd.f32 %v454, %v639
        %v816 = vadd.f32 %v456, %v750
        %v817 = vadd.f32 %v531, %v752
        %v818 = vadd.f32 %v539, %v643
        %v819 = vadd.f32 %v460, %v645
        %v820 = vadd.f32 %v462, %v756
        %v821 = vadd.f32 %v537, %v758
        %v822 = vmax.f32 %v814, 0.0
        %v823 = vmax.f32 %v815, 0.0
        %v824 = vmax.f32 %v816, 0.0
        %v825 = vmax.f32 %v817, 0.0
        %v826 = vmax.f32 %v818, 0.0
        %v827 = vmax.f32 %v819, 0.0
        %v828 = vmax.f32 %v820, 0.0
        %v829 = vmax.f32 %v821, 0.0
        %v830 = vadd.f32 %v456, %v661
        %v831 = vadd.f32 %v531, %v663
        %v832 = vadd.f32 %v533, %v774
        %v833 = vadd.f32 %v454, %v776
        %v834 = vadd.f32 %v462, %v667
        %v835 = vadd.f32 %v537, %v669
        %v836 = vadd.f32 %v539, %v780
        %v837 = vadd.f32 %v460, %v782
        %v838 = vmax.f32 %v830, 0.0
        %v839 = vmax.f32 %v831, 0.0
        %v840 = vmax.f32 %v832, 0.0
        %v841 = vmax.f32 %v833, 0.0
        %v842 = vmax.f32 %v834, 0.0
        %v843 = vmax.f32 %v835, 0.0
        %v844 = vmax.f32 %v836, 0.0
        %v845 = vmax.f32 %v837, 0.0
        %v846 = vadd.f32 %v454, %v822
        %v847 = vadd.f32 %v456, %v823
        %v848 = vadd.f32 %v531, %v824
        %v849 = vadd.f32 %v533, %v825
        %v850 = vadd.f32 %v460, %v826
        %v851 = vadd.f32 %v462, %v827
        %v852 = vadd.f32 %v537, %v828
        %v853 = vadd.f32 %v539, %v829
        %v854 = vadd.f32 %v846, %v838
        %v855 = vadd.f32 %v847, %v839
        %v856 = vadd.f32 %v848, %v840
        %v857 = vadd.f32 %v849, %v841
        %v858 = vadd.f32 %v850, %v842
        %v859 = vadd.f32 %v851, %v843
        %v860 = vadd.f32 %v852, %v844
        %v861 = vadd.f32 %v853, %v845
        %vm862 = vcmask 130048
        %v864 = vsel %vm862, %v253, 0
        %v867 = vsel %vm862, %v254, 0
        %869 = vmatprep.subr.mxu0 0.0
        %870 = vmatpush1.msra.mxu0 0.0
        %871 = vmatprep.subr.mxu0 0.0
        %872 = vmatpush1.msra.mxu0 0.0
        %873 = vmatprep.subr.mxu0 0.0
        %874 = vmatpush1.msra.mxu0 0.0
        %875 = vmatprep.subr.mxu0 0.0
        %876 = vmatpush1.msra.mxu0 0.0
        %877 = vmatprep.subr.mxu0 0.0
        %878 = vmatpush1.msra.mxu0 0.0
        %879 = vmatprep.subr.mxu0 0.0
        %880 = vmatpush1.msra.mxu0 0.0
        %881 = vmatprep.subr.mxu0 0.0
        %882 = vmatpush1.msra.mxu0 0.0
        %883 = vmatprep.subr.mxu0 0.0
        %884 = vmatpush1.msra.mxu0 0.0
        %885 = vmatprep.subr.mxu0 0.0
        %886 = vmatpush1.msra.mxu0 0.0
        %887 = vmatprep.subr.mxu0 0.0
        %888 = vmatpush1.msra.mxu0 0.0
        %889 = vmatprep.subr.mxu0 0.0
        %890 = vmatpush1.msra.mxu0 0.0
        %891 = vmatprep.subr.mxu0 0.0
        %892 = vmatpush1.msra.mxu0 0.0
        %893 = vmatprep.subr.mxu0 0.0
        %894 = vmatpush1.msra.mxu0 0.0
        %895 = vmatprep.subr.mxu0 0.0
        %896 = vmatpush1.msra.mxu0 0.0
        %897 = vmatprep.subr.mxu0 %v859
        %898 = vmatpush1.msra.mxu0 %v858
        %899 = vmatprep.subr.mxu0 %v855
        %900 = vmatpush1.msra.mxu0 %v854
        %901 = vmatprep.subr.mxu0 0.0
        %902 = vmatpush2.msra.mxu0 0.0
        %903 = vmatprep.subr.mxu0 0.0
        %904 = vmatpush2.msra.mxu0 0.0
        %905 = vmatprep.subr.mxu0 0.0
        %906 = vmatpush2.msra.mxu0 0.0
        %907 = vmatprep.subr.mxu0 0.0
        %908 = vmatpush2.msra.mxu0 0.0
        %909 = vmatprep.subr.mxu0 0.0
        %910 = vmatpush2.msra.mxu0 0.0
        %911 = vmatprep.subr.mxu0 0.0
        %912 = vmatpush2.msra.mxu0 0.0
        %913 = vmatprep.subr.mxu0 0.0
        %914 = vmatpush2.msra.mxu0 0.0
        %915 = vmatprep.subr.mxu0 0.0
        %916 = vmatpush2.msra.mxu0 0.0
        %917 = vmatprep.subr.mxu0 0.0
        %918 = vmatpush2.msra.mxu0 0.0
        %919 = vmatprep.subr.mxu0 0.0
        %920 = vmatpush2.msra.mxu0 0.0
        %921 = vmatprep.subr.mxu0 0.0
        %922 = vmatpush2.msra.mxu0 0.0
        %923 = vmatprep.subr.mxu0 0.0
        %924 = vmatpush2.msra.mxu0 0.0
        %925 = vmatprep.subr.mxu0 0.0
        %926 = vmatpush2.msra.mxu0 0.0
        %927 = vmatprep.subr.mxu0 0.0
        %928 = vmatpush2.msra.mxu0 0.0
        %929 = vmatprep.subr.mxu0 0.0
        %930 = vmatpush2.msra.mxu0 0.0
        %931 = vmatprep.subr.mxu0 0.0
        %932 = vmatpush2.msra.mxu0 0.0
        %933 = vmatprep.mubr.f32.mxu0 0.0
        %934 = vmatmul.mubr.f32.gmra.mxu0 %v864
        %v935 = vpop.f32.mrf.mxu0
        %v936 = vadd.f32 %v799, %v935
        %v937 = vpop.f32.mrf.mxu0
        %v938 = vadd.f32 %v799, %v937
        %939 = vmatprep.mubr.f32.mxu0 0.0
        %940 = vmatmul.mubr.f32.gmra.mxu0 %v867
        %v941 = vpop.f32.mrf.mxu0
        %v942 = vadd.f32 %v804, %v941
        %v943 = vpop.f32.mrf.mxu0
        %v944 = vadd.f32 %v804, %v943
        %945 = vdwg.mxu0
        %946 = vmatprep.subr.mxu0 0.0
        %947 = vmatpush1.msra.mxu0 0.0
        %948 = vmatprep.subr.mxu0 0.0
        %949 = vmatpush1.msra.mxu0 0.0
        %950 = vmatprep.subr.mxu0 0.0
        %951 = vmatpush1.msra.mxu0 0.0
        %952 = vmatprep.subr.mxu0 0.0
        %953 = vmatpush1.msra.mxu0 0.0
        %954 = vmatprep.subr.mxu0 0.0
        %955 = vmatpush1.msra.mxu0 0.0
        %956 = vmatprep.subr.mxu0 0.0
        %957 = vmatpush1.msra.mxu0 0.0
        %958 = vmatprep.subr.mxu0 0.0
        %959 = vmatpush1.msra.mxu0 0.0
        %960 = vmatprep.subr.mxu0 0.0
        %961 = vmatpush1.msra.mxu0 0.0
        %962 = vmatprep.subr.mxu0 0.0
        %963 = vmatpush1.msra.mxu0 0.0
        %964 = vmatprep.subr.mxu0 0.0
        %965 = vmatpush1.msra.mxu0 0.0
        %966 = vmatprep.subr.mxu0 0.0
        %967 = vmatpush1.msra.mxu0 0.0
        %968 = vmatprep.subr.mxu0 0.0
        %969 = vmatpush1.msra.mxu0 0.0
        %970 = vmatprep.subr.mxu0 0.0
        %971 = vmatpush1.msra.mxu0 0.0
        %972 = vmatprep.subr.mxu0 0.0
        %973 = vmatpush1.msra.mxu0 0.0
        %974 = vmatprep.subr.mxu0 %v861
        %975 = vmatpush1.msra.mxu0 %v860
        %976 = vmatprep.subr.mxu0 %v857
        %977 = vmatpush1.msra.mxu0 %v856
        %978 = vmatprep.subr.mxu0 0.0
        %979 = vmatpush2.msra.mxu0 0.0
        %980 = vmatprep.subr.mxu0 0.0
        %981 = vmatpush2.msra.mxu0 0.0
        %982 = vmatprep.subr.mxu0 0.0
        %983 = vmatpush2.msra.mxu0 0.0
        %984 = vmatprep.subr.mxu0 0.0
        %985 = vmatpush2.msra.mxu0 0.0
        %986 = vmatprep.subr.mxu0 0.0
        %987 = vmatpush2.msra.mxu0 0.0
        %988 = vmatprep.subr.mxu0 0.0
        %989 = vmatpush2.msra.mxu0 0.0
        %990 = vmatprep.subr.mxu0 0.0
        %991 = vmatpush2.msra.mxu0 0.0
        %992 = vmatprep.subr.mxu0 0.0
        %993 = vmatpush2.msra.mxu0 0.0
        %994 = vmatprep.subr.mxu0 0.0
        %995 = vmatpush2.msra.mxu0 0.0
        %996 = vmatprep.subr.mxu0 0.0
        %997 = vmatpush2.msra.mxu0 0.0
        %998 = vmatprep.subr.mxu0 0.0
        %999 = vmatpush2.msra.mxu0 0.0
        %1000 = vmatprep.subr.mxu0 0.0
        %1001 = vmatpush2.msra.mxu0 0.0
        %1002 = vmatprep.subr.mxu0 0.0
        %1003 = vmatpush2.msra.mxu0 0.0
        %1004 = vmatprep.subr.mxu0 0.0
        %1005 = vmatpush2.msra.mxu0 0.0
        %1006 = vmatprep.subr.mxu0 0.0
        %1007 = vmatpush2.msra.mxu0 0.0
        %1008 = vmatprep.subr.mxu0 0.0
        %1009 = vmatpush2.msra.mxu0 0.0
        %1010 = vmatprep.mubr.f32.mxu0 0.0
        %1011 = vmatmul.mubr.f32.gmra.mxu0 %v864
        %v1012 = vpop.f32.mrf.mxu0
        %v1013 = vadd.f32 %v799, %v1012
        %v1014 = vpop.f32.mrf.mxu0
        %v1015 = vadd.f32 %v799, %v1014
        %1016 = vmatprep.mubr.f32.mxu0 0.0
        %1017 = vmatmul.mubr.f32.gmra.mxu0 %v867
        %v1018 = vpop.f32.mrf.mxu0
        %v1019 = vadd.f32 %v804, %v1018
        %v1020 = vpop.f32.mrf.mxu0
        %v1021 = vadd.f32 %v804, %v1020
        %1022 = vdwg.mxu0
        %v1023 = vmax.f32 %v936, 0.0
        %v1024 = vmax.f32 %v938, 0.0
        %v1025 = vmax.f32 %v1013, 0.0
        %v1026 = vmax.f32 %v1015, 0.0
        %v1027 = vmax.f32 %v942, 0.0
        %v1028 = vmax.f32 %v944, 0.0
        %v1029 = vmax.f32 %v1019, 0.0
        %v1030 = vmax.f32 %v1021, 0.0
        %v1032 = vsel %vm862, %v255, 0
        %v1035 = vsel %vm862, %v256, 0
        %1037 = vmatprep.subr.mxu0 0.0
        %1038 = vmatpush1.msra.mxu0 0.0
        %1039 = vmatprep.subr.mxu0 0.0
        %1040 = vmatpush1.msra.mxu0 0.0
        %1041 = vmatprep.subr.mxu0 0.0
        %1042 = vmatpush1.msra.mxu0 0.0
        %1043 = vmatprep.subr.mxu0 0.0
        %1044 = vmatpush1.msra.mxu0 0.0
        %1045 = vmatprep.subr.mxu0 0.0
        %1046 = vmatpush1.msra.mxu0 0.0
        %1047 = vmatprep.subr.mxu0 0.0
        %1048 = vmatpush1.msra.mxu0 0.0
        %1049 = vmatprep.subr.mxu0 0.0
        %1050 = vmatpush1.msra.mxu0 0.0
        %1051 = vmatprep.subr.mxu0 0.0
        %1052 = vmatpush1.msra.mxu0 0.0
        %1053 = vmatprep.subr.mxu0 0.0
        %1054 = vmatpush1.msra.mxu0 0.0
        %1055 = vmatprep.subr.mxu0 0.0
        %1056 = vmatpush1.msra.mxu0 0.0
        %1057 = vmatprep.subr.mxu0 0.0
        %1058 = vmatpush1.msra.mxu0 0.0
        %1059 = vmatprep.subr.mxu0 0.0
        %1060 = vmatpush1.msra.mxu0 0.0
        %1061 = vmatprep.subr.mxu0 0.0
        %1062 = vmatpush1.msra.mxu0 0.0
        %1063 = vmatprep.subr.mxu0 0.0
        %1064 = vmatpush1.msra.mxu0 0.0
        %1065 = vmatprep.subr.mxu0 %v1028
        %1066 = vmatpush1.msra.mxu0 %v1027
        %1067 = vmatprep.subr.mxu0 %v1024
        %1068 = vmatpush1.msra.mxu0 %v1023
        %1069 = vmatprep.subr.mxu0 0.0
        %1070 = vmatpush2.msra.mxu0 0.0
        %1071 = vmatprep.subr.mxu0 0.0
        %1072 = vmatpush2.msra.mxu0 0.0
        %1073 = vmatprep.subr.mxu0 0.0
        %1074 = vmatpush2.msra.mxu0 0.0
        %1075 = vmatprep.subr.mxu0 0.0
        %1076 = vmatpush2.msra.mxu0 0.0
        %1077 = vmatprep.subr.mxu0 0.0
        %1078 = vmatpush2.msra.mxu0 0.0
        %1079 = vmatprep.subr.mxu0 0.0
        %1080 = vmatpush2.msra.mxu0 0.0
        %1081 = vmatprep.subr.mxu0 0.0
        %1082 = vmatpush2.msra.mxu0 0.0
        %1083 = vmatprep.subr.mxu0 0.0
        %1084 = vmatpush2.msra.mxu0 0.0
        %1085 = vmatprep.subr.mxu0 0.0
        %1086 = vmatpush2.msra.mxu0 0.0
        %1087 = vmatprep.subr.mxu0 0.0
        %1088 = vmatpush2.msra.mxu0 0.0
        %1089 = vmatprep.subr.mxu0 0.0
        %1090 = vmatpush2.msra.mxu0 0.0
        %1091 = vmatprep.subr.mxu0 0.0
        %1092 = vmatpush2.msra.mxu0 0.0
        %1093 = vmatprep.subr.mxu0 0.0
        %1094 = vmatpush2.msra.mxu0 0.0
        %1095 = vmatprep.subr.mxu0 0.0
        %1096 = vmatpush2.msra.mxu0 0.0
        %1097 = vmatprep.subr.mxu0 0.0
        %1098 = vmatpush2.msra.mxu0 0.0
        %1099 = vmatprep.subr.mxu0 0.0
        %1100 = vmatpush2.msra.mxu0 0.0
        %1101 = vmatprep.mubr.f32.mxu0 0.0
        %1102 = vmatmul.mubr.f32.gmra.mxu0 %v1032
        %v1103 = vpop.f32.mrf.mxu0
        %v1104 = vadd.f32 %v808, %v1103
        %v1105 = vpop.f32.mrf.mxu0
        %v1106 = vadd.f32 %v808, %v1105
        %1107 = vmatprep.mubr.f32.mxu0 0.0
        %1108 = vmatmul.mubr.f32.gmra.mxu0 %v1035
        %v1109 = vpop.f32.mrf.mxu0
        %v1110 = vadd.f32 %v812, %v1109
        %v1111 = vpop.f32.mrf.mxu0
        %v1112 = vadd.f32 %v812, %v1111
        %1113 = vdwg.mxu0
        %1114 = vmatprep.subr.mxu0 0.0
        %1115 = vmatpush1.msra.mxu0 0.0
        %1116 = vmatprep.subr.mxu0 0.0
        %1117 = vmatpush1.msra.mxu0 0.0
        %1118 = vmatprep.subr.mxu0 0.0
        %1119 = vmatpush1.msra.mxu0 0.0
        %1120 = vmatprep.subr.mxu0 0.0
        %1121 = vmatpush1.msra.mxu0 0.0
        %1122 = vmatprep.subr.mxu0 0.0
        %1123 = vmatpush1.msra.mxu0 0.0
        %1124 = vmatprep.subr.mxu0 0.0
        %1125 = vmatpush1.msra.mxu0 0.0
        %1126 = vmatprep.subr.mxu0 0.0
        %1127 = vmatpush1.msra.mxu0 0.0
        %1128 = vmatprep.subr.mxu0 0.0
        %1129 = vmatpush1.msra.mxu0 0.0
        %1130 = vmatprep.subr.mxu0 0.0
        %1131 = vmatpush1.msra.mxu0 0.0
        %1132 = vmatprep.subr.mxu0 0.0
        %1133 = vmatpush1.msra.mxu0 0.0
        %1134 = vmatprep.subr.mxu0 0.0
        %1135 = vmatpush1.msra.mxu0 0.0
        %1136 = vmatprep.subr.mxu0 0.0
        %1137 = vmatpush1.msra.mxu0 0.0
        %1138 = vmatprep.subr.mxu0 0.0
        %1139 = vmatpush1.msra.mxu0 0.0
        %1140 = vmatprep.subr.mxu0 0.0
        %1141 = vmatpush1.msra.mxu0 0.0
        %1142 = vmatprep.subr.mxu0 %v1030
        %1143 = vmatpush1.msra.mxu0 %v1029
        %1144 = vmatprep.subr.mxu0 %v1026
        %1145 = vmatpush1.msra.mxu0 %v1025
        %1146 = vmatprep.subr.mxu0 0.0
        %1147 = vmatpush2.msra.mxu0 0.0
        %1148 = vmatprep.subr.mxu0 0.0
        %1149 = vmatpush2.msra.mxu0 0.0
        %1150 = vmatprep.subr.mxu0 0.0
        %1151 = vmatpush2.msra.mxu0 0.0
        %1152 = vmatprep.subr.mxu0 0.0
        %1153 = vmatpush2.msra.mxu0 0.0
        %1154 = vmatprep.subr.mxu0 0.0
        %1155 = vmatpush2.msra.mxu0 0.0
        %1156 = vmatprep.subr.mxu0 0.0
        %1157 = vmatpush2.msra.mxu0 0.0
        %1158 = vmatprep.subr.mxu0 0.0
        %1159 = vmatpush2.msra.mxu0 0.0
        %1160 = vmatprep.subr.mxu0 0.0
        %1161 = vmatpush2.msra.mxu0 0.0
        %1162 = vmatprep.subr.mxu0 0.0
        %1163 = vmatpush2.msra.mxu0 0.0
        %1164 = vmatprep.subr.mxu0 0.0
        %1165 = vmatpush2.msra.mxu0 0.0
        %1166 = vmatprep.subr.mxu0 0.0
        %1167 = vmatpush2.msra.mxu0 0.0
        %1168 = vmatprep.subr.mxu0 0.0
        %1169 = vmatpush2.msra.mxu0 0.0
        %1170 = vmatprep.subr.mxu0 0.0
        %1171 = vmatpush2.msra.mxu0 0.0
        %1172 = vmatprep.subr.mxu0 0.0
        %1173 = vmatpush2.msra.mxu0 0.0
        %1174 = vmatprep.subr.mxu0 0.0
        %1175 = vmatpush2.msra.mxu0 0.0
        %1176 = vmatprep.subr.mxu0 0.0
        %1177 = vmatpush2.msra.mxu0 0.0
        %1178 = vmatprep.mubr.f32.mxu0 0.0
        %1179 = vmatmul.mubr.f32.gmra.mxu0 %v1032
        %v1180 = vpop.f32.mrf.mxu0
        %v1181 = vadd.f32 %v808, %v1180
        %v1182 = vpop.f32.mrf.mxu0
        %v1183 = vadd.f32 %v808, %v1182
        %1184 = vmatprep.mubr.f32.mxu0 0.0
        %1185 = vmatmul.mubr.f32.gmra.mxu0 %v1035
        %v1186 = vpop.f32.mrf.mxu0
        %v1187 = vadd.f32 %v812, %v1186
        %v1188 = vpop.f32.mrf.mxu0
        %v1189 = vadd.f32 %v812, %v1188
        %1190 = vdwg.mxu0
        %v1191 = vmax.f32 %v1104, 0.0
        %v1192 = vmax.f32 %v1106, 0.0
        %v1193 = vmax.f32 %v1181, 0.0
        %v1194 = vmax.f32 %v1183, 0.0
        %v1195 = vmax.f32 %v1110, 0.0
        %v1196 = vmax.f32 %v1112, 0.0
        %v1197 = vmax.f32 %v1187, 0.0
        %v1198 = vmax.f32 %v1189, 0.0
        %v1199 = vadd.f32 %v1194, %v649
        %v1200 = vadd.f32 %v1191, %v651
        %v1201 = vadd.f32 %v1192, %v762
        %v1202 = vadd.f32 %v1193, %v764
        %v1203 = vadd.f32 %v1198, %v655
        %v1204 = vadd.f32 %v1195, %v657
        %v1205 = vadd.f32 %v1196, %v768
        %v1206 = vadd.f32 %v1197, %v770
        %v1207 = vmax.f32 %v1199, 0.0
        %v1208 = vmax.f32 %v1200, 0.0
        %v1209 = vmax.f32 %v1201, 0.0
        %v1210 = vmax.f32 %v1202, 0.0
        %v1211 = vmax.f32 %v1203, 0.0
        %v1212 = vmax.f32 %v1204, 0.0
        %v1213 = vmax.f32 %v1205, 0.0
        %v1214 = vmax.f32 %v1206, 0.0
        %v1215 = vadd.f32 %v1192, %v673
        %v1216 = vadd.f32 %v1193, %v675
        %v1217 = vadd.f32 %v1194, %v786
        %v1218 = vadd.f32 %v1191, %v788
        %v1219 = vadd.f32 %v1196, %v679
        %v1220 = vadd.f32 %v1197, %v681
        %v1221 = vadd.f32 %v1198, %v792
        %v1222 = vadd.f32 %v1195, %v794
        %v1223 = vmax.f32 %v1215, 0.0
        %v1224 = vmax.f32 %v1216, 0.0
        %v1225 = vmax.f32 %v1217, 0.0
        %v1226 = vmax.f32 %v1218, 0.0
        %v1227 = vmax.f32 %v1219, 0.0
        %v1228 = vmax.f32 %v1220, 0.0
        %v1229 = vmax.f32 %v1221, 0.0
        %v1230 = vmax.f32 %v1222, 0.0
        %v1231 = vadd.f32 %v1191, %v1207
        %v1232 = vadd.f32 %v1192, %v1208
        %v1233 = vadd.f32 %v1193, %v1209
        %v1234 = vadd.f32 %v1194, %v1210
        %v1235 = vadd.f32 %v1195, %v1211
        %v1236 = vadd.f32 %v1196, %v1212
        %v1237 = vadd.f32 %v1197, %v1213
        %v1238 = vadd.f32 %v1198, %v1214
        %v1239 = vadd.f32 %v1231, %v1223
        %v1240 = vadd.f32 %v1232, %v1224
        %v1241 = vadd.f32 %v1233, %v1225
        %v1242 = vadd.f32 %v1234, %v1226
        %v1243 = vadd.f32 %v1235, %v1227
        %v1244 = vadd.f32 %v1236, %v1228
        %v1245 = vadd.f32 %v1237, %v1229
        %v1246 = vadd.f32 %v1238, %v1230
        %1247 = vmatprep.subr.mxu0 0.0
        %1248 = vmatpush1.msra.mxu0 0.0
        %1249 = vmatprep.subr.mxu0 0.0
        %1250 = vmatpush1.msra.mxu0 0.0
        %1251 = vmatprep.subr.mxu0 0.0
        %1252 = vmatpush1.msra.mxu0 0.0
        %1253 = vmatprep.subr.mxu0 0.0
        %1254 = vmatpush1.msra.mxu0 0.0
        %1255 = vmatprep.subr.mxu0 0.0
        %1256 = vmatpush1.msra.mxu0 0.0
        %1257 = vmatprep.subr.mxu0 0.0
        %1258 = vmatpush1.msra.mxu0 0.0
        %1259 = vmatprep.subr.mxu0 0.0
        %1260 = vmatpush1.msra.mxu0 0.0
        %1261 = vmatprep.subr.mxu0 0.0
        %1262 = vmatpush1.msra.mxu0 0.0
        %1263 = vmatprep.subr.mxu0 0.0
        %1264 = vmatpush1.msra.mxu0 0.0
        %1265 = vmatprep.subr.mxu0 0.0
        %1266 = vmatpush1.msra.mxu0 0.0
        %1267 = vmatprep.subr.mxu0 0.0
        %1268 = vmatpush1.msra.mxu0 0.0
        %1269 = vmatprep.subr.mxu0 0.0
        %1270 = vmatpush1.msra.mxu0 0.0
        %1271 = vmatprep.subr.mxu0 0.0
        %1272 = vmatpush1.msra.mxu0 0.0
        %1273 = vmatprep.subr.mxu0 0.0
        %1274 = vmatpush1.msra.mxu0 0.0
        %1275 = vmatprep.subr.mxu0 %v1244
        %1276 = vmatpush1.msra.mxu0 %v1243
        %1277 = vmatprep.subr.mxu0 %v1240
        %1278 = vmatpush1.msra.mxu0 %v1239
        %1279 = vmatprep.subr.mxu0 0.0
        %1280 = vmatpush2.msra.mxu0 0.0
        %1281 = vmatprep.subr.mxu0 0.0
        %1282 = vmatpush2.msra.mxu0 0.0
        %1283 = vmatprep.subr.mxu0 0.0
        %1284 = vmatpush2.msra.mxu0 0.0
        %1285 = vmatprep.subr.mxu0 0.0
        %1286 = vmatpush2.msra.mxu0 0.0
        %1287 = vmatprep.subr.mxu0 0.0
        %1288 = vmatpush2.msra.mxu0 0.0
        %1289 = vmatprep.subr.mxu0 0.0
        %1290 = vmatpush2.msra.mxu0 0.0
        %1291 = vmatprep.subr.mxu0 0.0
        %1292 = vmatpush2.msra.mxu0 0.0
        %1293 = vmatprep.subr.mxu0 0.0
        %1294 = vmatpush2.msra.mxu0 0.0
        %1295 = vmatprep.subr.mxu0 0.0
        %1296 = vmatpush2.msra.mxu0 0.0
        %1297 = vmatprep.subr.mxu0 0.0
        %1298 = vmatpush2.msra.mxu0 0.0
        %1299 = vmatprep.subr.mxu0 0.0
        %1300 = vmatpush2.msra.mxu0 0.0
        %1301 = vmatprep.subr.mxu0 0.0
        %1302 = vmatpush2.msra.mxu0 0.0
        %1303 = vmatprep.subr.mxu0 0.0
        %1304 = vmatpush2.msra.mxu0 0.0
        %1305 = vmatprep.subr.mxu0 0.0
        %1306 = vmatpush2.msra.mxu0 0.0
        %1307 = vmatprep.subr.mxu0 0.0
        %1308 = vmatpush2.msra.mxu0 0.0
        %1309 = vmatprep.subr.mxu0 0.0
        %1310 = vmatpush2.msra.mxu0 0.0
        %1311 = vmatprep.mubr.f32.mxu0 0.0
        %1312 = vmatmul.mubr.f32.gmra.mxu0 %v864
        %v1313 = vpop.f32.mrf.mxu0
        %v1314 = vadd.f32 %v799, %v1313
        %v1315 = vpop.f32.mrf.mxu0
        %v1316 = vadd.f32 %v799, %v1315
        %1317 = vmatprep.mubr.f32.mxu0 0.0
        %1318 = vmatmul.mubr.f32.gmra.mxu0 %v867
        %v1319 = vpop.f32.mrf.mxu0
        %v1320 = vadd.f32 %v804, %v1319
        %v1321 = vpop.f32.mrf.mxu0
        %v1322 = vadd.f32 %v804, %v1321
        %1323 = vdwg.mxu0
        %1324 = vmatprep.subr.mxu0 0.0
        %1325 = vmatpush1.msra.mxu0 0.0
        %1326 = vmatprep.subr.mxu0 0.0
        %1327 = vmatpush1.msra.mxu0 0.0
        %1328 = vmatprep.subr.mxu0 0.0
        %1329 = vmatpush1.msra.mxu0 0.0
        %1330 = vmatprep.subr.mxu0 0.0
        %1331 = vmatpush1.msra.mxu0 0.0
        %1332 = vmatprep.subr.mxu0 0.0
        %1333 = vmatpush1.msra.mxu0 0.0
        %1334 = vmatprep.subr.mxu0 0.0
        %1335 = vmatpush1.msra.mxu0 0.0
        %1336 = vmatprep.subr.mxu0 0.0
        %1337 = vmatpush1.msra.mxu0 0.0
        %1338 = vmatprep.subr.mxu0 0.0
        %1339 = vmatpush1.msra.mxu0 0.0
        %1340 = vmatprep.subr.mxu0 0.0
        %1341 = vmatpush1.msra.mxu0 0.0
        %1342 = vmatprep.subr.mxu0 0.0
        %1343 = vmatpush1.msra.mxu0 0.0
        %1344 = vmatprep.subr.mxu0 0.0
        %1345 = vmatpush1.msra.mxu0 0.0
        %1346 = vmatprep.subr.mxu0 0.0
        %1347 = vmatpush1.msra.mxu0 0.0
        %1348 = vmatprep.subr.mxu0 0.0
        %1349 = vmatpush1.msra.mxu0 0.0
        %1350 = vmatprep.subr.mxu0 0.0
        %1351 = vmatpush1.msra.mxu0 0.0
        %1352 = vmatprep.subr.mxu0 %v1246
        %1353 = vmatpush1.msra.mxu0 %v1245
        %1354 = vmatprep.subr.mxu0 %v1242
        %1355 = vmatpush1.msra.mxu0 %v1241
        %1356 = vmatprep.subr.mxu0 0.0
        %1357 = vmatpush2.msra.mxu0 0.0
        %1358 = vmatprep.subr.mxu0 0.0
        %1359 = vmatpush2.msra.mxu0 0.0
        %1360 = vmatprep.subr.mxu0 0.0
        %1361 = vmatpush2.msra.mxu0 0.0
        %1362 = vmatprep.subr.mxu0 0.0
        %1363 = vmatpush2.msra.mxu0 0.0
        %1364 = vmatprep.subr.mxu0 0.0
        %1365 = vmatpush2.msra.mxu0 0.0
        %1366 = vmatprep.subr.mxu0 0.0
        %1367 = vmatpush2.msra.mxu0 0.0
        %1368 = vmatprep.subr.mxu0 0.0
        %1369 = vmatpush2.msra.mxu0 0.0
        %1370 = vmatprep.subr.mxu0 0.0
        %1371 = vmatpush2.msra.mxu0 0.0
        %1372 = vmatprep.subr.mxu0 0.0
        %1373 = vmatpush2.msra.mxu0 0.0
        %1374 = vmatprep.subr.mxu0 0.0
        %1375 = vmatpush2.msra.mxu0 0.0
        %1376 = vmatprep.subr.mxu0 0.0
        %1377 = vmatpush2.msra.mxu0 0.0
        %1378 = vmatprep.subr.mxu0 0.0
        %1379 = vmatpush2.msra.mxu0 0.0
        %1380 = vmatprep.subr.mxu0 0.0
        %1381 = vmatpush2.msra.mxu0 0.0
        %1382 = vmatprep.subr.mxu0 0.0
        %1383 = vmatpush2.msra.mxu0 0.0
        %1384 = vmatprep.subr.mxu0 0.0
        %1385 = vmatpush2.msra.mxu0 0.0
        %1386 = vmatprep.subr.mxu0 0.0
        %1387 = vmatpush2.msra.mxu0 0.0
        %1388 = vmatprep.mubr.f32.mxu0 0.0
        %1389 = vmatmul.mubr.f32.gmra.mxu0 %v864
        %v1390 = vpop.f32.mrf.mxu0
        %v1391 = vadd.f32 %v799, %v1390
        %v1392 = vpop.f32.mrf.mxu0
        %v1393 = vadd.f32 %v799, %v1392
        %1394 = vmatprep.mubr.f32.mxu0 0.0
        %1395 = vmatmul.mubr.f32.gmra.mxu0 %v867
        %v1396 = vpop.f32.mrf.mxu0
        %v1397 = vadd.f32 %v804, %v1396
        %v1398 = vpop.f32.mrf.mxu0
        %v1399 = vadd.f32 %v804, %v1398
        %1400 = vdwg.mxu0
        %v1401 = vmax.f32 %v1314, 0.0
        %v1402 = vmax.f32 %v1316, 0.0
        %v1403 = vmax.f32 %v1391, 0.0
        %v1404 = vmax.f32 %v1393, 0.0
        %v1405 = vmax.f32 %v1320, 0.0
        %v1406 = vmax.f32 %v1322, 0.0
        %v1407 = vmax.f32 %v1397, 0.0
        %v1408 = vmax.f32 %v1399, 0.0
        %1409 = vmatprep.subr.mxu0 0.0
        %1410 = vmatpush1.msra.mxu0 0.0
        %1411 = vmatprep.subr.mxu0 0.0
        %1412 = vmatpush1.msra.mxu0 0.0
        %1413 = vmatprep.subr.mxu0 0.0
        %1414 = vmatpush1.msra.mxu0 0.0
        %1415 = vmatprep.subr.mxu0 0.0
        %1416 = vmatpush1.msra.mxu0 0.0
        %1417 = vmatprep.subr.mxu0 0.0
        %1418 = vmatpush1.msra.mxu0 0.0
        %1419 = vmatprep.subr.mxu0 0.0
        %1420 = vmatpush1.msra.mxu0 0.0
        %1421 = vmatprep.subr.mxu0 0.0
        %1422 = vmatpush1.msra.mxu0 0.0
        %1423 = vmatprep.subr.mxu0 0.0
        %1424 = vmatpush1.msra.mxu0 0.0
        %1425 = vmatprep.subr.mxu0 0.0
        %1426 = vmatpush1.msra.mxu0 0.0
        %1427 = vmatprep.subr.mxu0 0.0
        %1428 = vmatpush1.msra.mxu0 0.0
        %1429 = vmatprep.subr.mxu0 0.0
        %1430 = vmatpush1.msra.mxu0 0.0
        %1431 = vmatprep.subr.mxu0 0.0
        %1432 = vmatpush1.msra.mxu0 0.0
        %1433 = vmatprep.subr.mxu0 0.0
        %1434 = vmatpush1.msra.mxu0 0.0
        %1435 = vmatprep.subr.mxu0 0.0
        %1436 = vmatpush1.msra.mxu0 0.0
        %1437 = vmatprep.subr.mxu0 %v1406
        %1438 = vmatpush1.msra.mxu0 %v1405
        %1439 = vmatprep.subr.mxu0 %v1402
        %1440 = vmatpush1.msra.mxu0 %v1401
        %1441 = vmatprep.subr.mxu0 0.0
        %1442 = vmatpush2.msra.mxu0 0.0
        %1443 = vmatprep.subr.mxu0 0.0
        %1444 = vmatpush2.msra.mxu0 0.0
        %1445 = vmatprep.subr.mxu0 0.0
        %1446 = vmatpush2.msra.mxu0 0.0
        %1447 = vmatprep.subr.mxu0 0.0
        %1448 = vmatpush2.msra.mxu0 0.0
        %1449 = vmatprep.subr.mxu0 0.0
        %1450 = vmatpush2.msra.mxu0 0.0
        %1451 = vmatprep.subr.mxu0 0.0
        %1452 = vmatpush2.msra.mxu0 0.0
        %1453 = vmatprep.subr.mxu0 0.0
        %1454 = vmatpush2.msra.mxu0 0.0
        %1455 = vmatprep.subr.mxu0 0.0
        %1456 = vmatpush2.msra.mxu0 0.0
        %1457 = vmatprep.subr.mxu0 0.0
        %1458 = vmatpush2.msra.mxu0 0.0
        %1459 = vmatprep.subr.mxu0 0.0
        %1460 = vmatpush2.msra.mxu0 0.0
        %1461 = vmatprep.subr.mxu0 0.0
        %1462 = vmatpush2.msra.mxu0 0.0
        %1463 = vmatprep.subr.mxu0 0.0
        %1464 = vmatpush2.msra.mxu0 0.0
        %1465 = vmatprep.subr.mxu0 0.0
        %1466 = vmatpush2.msra.mxu0 0.0
        %1467 = vmatprep.subr.mxu0 0.0
        %1468 = vmatpush2.msra.mxu0 0.0
        %1469 = vmatprep.subr.mxu0 0.0
        %1470 = vmatpush2.msra.mxu0 0.0
        %1471 = vmatprep.subr.mxu0 0.0
        %1472 = vmatpush2.msra.mxu0 0.0
        %1473 = vmatprep.mubr.f32.mxu0 0.0
        %1474 = vmatmul.mubr.f32.gmra.mxu0 %v1032
        %v1475 = vpop.f32.mrf.mxu0
        %v1476 = vadd.f32 %v808, %v1475
        %v1477 = vpop.f32.mrf.mxu0
        %v1478 = vadd.f32 %v808, %v1477
        %1479 = vmatprep.mubr.f32.mxu0 0.0
        %1480 = vmatmul.mubr.f32.gmra.mxu0 %v1035
        %v1481 = vpop.f32.mrf.mxu0
        %v1482 = vadd.f32 %v812, %v1481
        %v1483 = vpop.f32.mrf.mxu0
        %v1484 = vadd.f32 %v812, %v1483
        %1485 = vdwg.mxu0
        %1486 = vmatprep.subr.mxu0 0.0
        %1487 = vmatpush1.msra.mxu0 0.0
        %1488 = vmatprep.subr.mxu0 0.0
        %1489 = vmatpush1.msra.mxu0 0.0
        %1490 = vmatprep.subr.mxu0 0.0
        %1491 = vmatpush1.msra.mxu0 0.0
        %1492 = vmatprep.subr.mxu0 0.0
        %1493 = vmatpush1.msra.mxu0 0.0
        %1494 = vmatprep.subr.mxu0 0.0
        %1495 = vmatpush1.msra.mxu0 0.0
        %1496 = vmatprep.subr.mxu0 0.0
        %1497 = vmatpush1.msra.mxu0 0.0
        %1498 = vmatprep.subr.mxu0 0.0
        %1499 = vmatpush1.msra.mxu0 0.0
        %1500 = vmatprep.subr.mxu0 0.0
        %1501 = vmatpush1.msra.mxu0 0.0
        %1502 = vmatprep.subr.mxu0 0.0
        %1503 = vmatpush1.msra.mxu0 0.0
        %1504 = vmatprep.subr.mxu0 0.0
        %1505 = vmatpush1.msra.mxu0 0.0
        %1506 = vmatprep.subr.mxu0 0.0
        %1507 = vmatpush1.msra.mxu0 0.0
        %1508 = vmatprep.subr.mxu0 0.0
        %1509 = vmatpush1.msra.mxu0 0.0
        %1510 = vmatprep.subr.mxu0 0.0
        %1511 = vmatpush1.msra.mxu0 0.0
        %1512 = vmatprep.subr.mxu0 0.0
        %1513 = vmatpush1.msra.mxu0 0.0
        %1514 = vmatprep.subr.mxu0 %v1408
        %1515 = vmatpush1.msra.mxu0 %v1407
        %1516 = vmatprep.subr.mxu0 %v1404
        %1517 = vmatpush1.msra.mxu0 %v1403
        %1518 = vmatprep.subr.mxu0 0.0
        %1519 = vmatpush2.msra.mxu0 0.0
        %1520 = vmatprep.subr.mxu0 0.0
        %1521 = vmatpush2.msra.mxu0 0.0
        %1522 = vmatprep.subr.mxu0 0.0
        %1523 = vmatpush2.msra.mxu0 0.0
        %1524 = vmatprep.subr.mxu0 0.0
        %1525 = vmatpush2.msra.mxu0 0.0
        %1526 = vmatprep.subr.mxu0 0.0
        %1527 = vmatpush2.msra.mxu0 0.0
        %1528 = vmatprep.subr.mxu0 0.0
        %1529 = vmatpush2.msra.mxu0 0.0
        %1530 = vmatprep.subr.mxu0 0.0
        %1531 = vmatpush2.msra.mxu0 0.0
        %1532 = vmatprep.subr.mxu0 0.0
        %1533 = vmatpush2.msra.mxu0 0.0
        %1534 = vmatprep.subr.mxu0 0.0
        %1535 = vmatpush2.msra.mxu0 0.0
        %1536 = vmatprep.subr.mxu0 0.0
        %1537 = vmatpush2.msra.mxu0 0.0
        %1538 = vmatprep.subr.mxu0 0.0
        %1539 = vmatpush2.msra.mxu0 0.0
        %1540 = vmatprep.subr.mxu0 0.0
        %1541 = vmatpush2.msra.mxu0 0.0
        %1542 = vmatprep.subr.mxu0 0.0
        %1543 = vmatpush2.msra.mxu0 0.0
        %1544 = vmatprep.subr.mxu0 0.0
        %1545 = vmatpush2.msra.mxu0 0.0
        %1546 = vmatprep.subr.mxu0 0.0
        %1547 = vmatpush2.msra.mxu0 0.0
        %1548 = vmatprep.subr.mxu0 0.0
        %1549 = vmatpush2.msra.mxu0 0.0
        %1550 = vmatprep.mubr.f32.mxu0 0.0
        %1551 = vmatmul.mubr.f32.gmra.mxu0 %v1032
        %v1552 = vpop.f32.mrf.mxu0
        %v1553 = vadd.f32 %v808, %v1552
        %v1554 = vpop.f32.mrf.mxu0
        %v1555 = vadd.f32 %v808, %v1554
        %1556 = vmatprep.mubr.f32.mxu0 0.0
        %1557 = vmatmul.mubr.f32.gmra.mxu0 %v1035
        %v1558 = vpop.f32.mrf.mxu0
        %v1559 = vadd.f32 %v812, %v1558
        %v1560 = vpop.f32.mrf.mxu0
        %v1561 = vadd.f32 %v812, %v1560
        %1562 = vdwg.mxu0
        %v1563 = vmax.f32 %v1476, 0.0
        %v1564 = vmax.f32 %v1478, 0.0
        %v1565 = vmax.f32 %v1553, 0.0
        %v1566 = vmax.f32 %v1555, 0.0
        %v1567 = vmax.f32 %v1482, 0.0
        %v1568 = vmax.f32 %v1484, 0.0
        %v1569 = vmax.f32 %v1559, 0.0
        %v1570 = vmax.f32 %v1561, 0.0
        %v1571 = vadd.f32 %v1563, %v1564
        %v1572 = vadd.f32 %v1567, %v1568
        %v1573 = vadd.f32 %v1571, %v1565
        %v1574 = vadd.f32 %v1572, %v1569
        %v1575 = vadd.f32 %v1573, %v1566
        %v1576 = vadd.f32 %v1574, %v1570
        %v1577 = vmul.f32 %v1575, 0.25
        %v1578 = vmul.f32 %v1576, 0.25
        %1579 = vst [vmem:[%s230] sm:$0xff] %v1577
        %1580 = vst [vmem:[%s230 + $0x8] sm:$0xff] %v1578
        %s1581 = sand.u32 %s142, 1
        %s1582 = scalar_lea.sflag [#allocation3], %s1581
        %s1583 = sand.u32 %s142, 1
        %s1584 = smul.addr %s1583, 16
        %s1585 = scalar_lea.vmem [#allocation2], %s1584
        // Predicated region
        $region41: #{tpu_custom_call.1} parent=39 // pred_check
          %p1586 = pneg %p152
        $region42: #{tpu_custom_call.1} parent=39 // pred_check_branch
          %1588 = sbr.rel (%p1586) target = $region44
        $region43: #{tpu_custom_call.1} parent=39 // pred_region
          %s1590 = ssub.s32 256, 256
          %1591 = vsyncadd %s1582, %s1590
          %s1592 = smul.addr %s19, 2
          %s1593 = smul.addr %s1592, 128
          %s1594 = scalar_lea.hbm %s5, %s1593
          %s1595 = sshll.u32 %s1585, 4
          %s1596 = int_to_ptr.vmem [resolvable:$true] %s1595
          %1601 = dma.vmem_to_hbm [thread:$0]  %s1596, 256, %s1594, %s1582, 128, 128, 8
        $region44: #{tpu_custom_call.1} parent=39 // pred_fallthru
          _
      $region40: #{tpu_custom_call.1} parent=5 // pred_fallthru
        _
      %p1602 = scmp.le.s32.totalorder 2, %s14
      // Predicated region
      $region45: #{tpu_custom_call.1} parent=5 // pred_check
        %p1603 = pneg %p1602
      $region46: #{tpu_custom_call.1} parent=5 // pred_check_branch
        %1605 = sbr.rel (%p1603) target = $region48
      $region47: #{tpu_custom_call.1} parent=5 // pred_region
        %s1606 = ssub.s32 %s14, 2
        // Predicated region
        $region49: #{tpu_custom_call.1} parent=47 // pred_check
          %p1607 = pneg %p158
        $region50: #{tpu_custom_call.1} parent=47 // pred_check_branch
          %1609 = sbr.rel (%p1607) target = $region52
        $region51: #{tpu_custom_call.1} parent=47 // pred_region
          %s1610 = sand.u32 %s143, 1
          %s1611 = scalar_lea.sflag [#allocation3], %s1610
          %s1612 = sand.u32 %s143, 1
          %s1613 = smul.addr %s1612, 16
          %s1614 = scalar_lea.vmem [#allocation2], %s1613
          %1615 = dma.done %s1611, 256
        $region52: #{tpu_custom_call.1} parent=47 // pred_fallthru
          _
      $region48: #{tpu_custom_call.1} parent=5 // pred_fallthru
        _
    $region6: #{tpu_custom_call.1} parent=1 // loop_footer
      %s18 = sadd.s32 1, %s14
    $region7: #{tpu_custom_call.1} parent=1 // loop_footer_branch
      %13 = sbr.rel target = $region3
    $region8: #{tpu_custom_call.1} parent=1 // loop_exit
      _
    %1616 = vsyncpa [#allocation3], 1
    %s1617 = scalar_lea.sflag [#allocation3], 1
    %1618 = vsyncpa %s1617, 1

</llo_original>
